<compile_context>
chip_gen: v5e
topology: v5e:2x2
jax: 0.10.0
libtpu: 0.0.40
codegen_flags: <defaults>
</compile_context>

<pallas_src>
import functools

import numpy as np
import jax
import jax.numpy as jnp
from jax.experimental import pallas as pl
from jax.experimental.pallas import tpu as pltpu

IN_FEATURES = 1024   # encoder input  (cat of two 512-d child embeddings)
OUT_FEATURES = 512   # encoder output (node embedding)


# ----------------------------- Pallas kernel -------------------------------
def rae_tree_kernel(nodes_ref, lkid_ref, rkid_ref,          # SMEM (prefetched)
                    inp_ref, wtop_ref, wbot_ref, bias_ref,  # VMEM (resident)
                    emb_ref):                               # VMEM output (resident)
    step = pl.program_id(0)

    # One-time init: seed the resident embedding table with the input rows
    # (leaves read from here; internal rows get overwritten below).
    @pl.when(step == 0)
    def _():
        emb_ref[...] = inp_ref[...]

    node = nodes_ref[step]
    a = emb_ref[lkid_ref[step]]          # (1, 512) f32 child embedding
    b = emb_ref[rkid_ref[step]]          # (1, 512) f32 child embedding

    # tanh(cat(a, b) @ W^T + bias) == tanh(a @ W_top + b @ W_bot + bias)
    acc = jnp.dot(a.astype(jnp.bfloat16), wtop_ref[...],
                  preferred_element_type=jnp.float32)
    acc = acc + jnp.dot(b.astype(jnp.bfloat16), wbot_ref[...],
                        preferred_element_type=jnp.float32)
    emb_ref[node] = jnp.tanh(acc + bias_ref[...])            # f32 epilogue


# ------------------------------ host wrapper --------------------------------
def make_rae_tree_forward(W, bias_vec):
    """W: (512, 1024) f32 Linear weight, bias_vec: (512,) f32."""
    wtop = jnp.asarray(W[:, :OUT_FEATURES].T, dtype=jnp.bfloat16)   # (512, 512)
    wbot = jnp.asarray(W[:, OUT_FEATURES:].T, dtype=jnp.bfloat16)   # (512, 512)
    bias = jnp.asarray(bias_vec.reshape(1, OUT_FEATURES), dtype=jnp.float32)

    @functools.lru_cache(maxsize=None)
    def build(num_nodes, n_internal):
        weight_bytes = 2 * OUT_FEATURES * OUT_FEATURES * 2          # bf16
        emb_bytes = num_nodes * OUT_FEATURES * 4
        cost = pl.CostEstimate(
            flops=2 * n_internal * IN_FEATURES * OUT_FEATURES,
            transcendentals=n_internal * OUT_FEATURES,
            bytes_accessed=weight_bytes + 2 * emb_bytes + 4 * OUT_FEATURES,
        )
        grid_spec = pltpu.PrefetchScalarGridSpec(
            num_scalar_prefetch=3,
            grid=(n_internal,),
            in_specs=[
                pl.BlockSpec((num_nodes, 1, OUT_FEATURES), lambda i, *_: (0, 0, 0)),
                pl.BlockSpec((OUT_FEATURES, OUT_FEATURES), lambda i, *_: (0, 0)),
                pl.BlockSpec((OUT_FEATURES, OUT_FEATURES), lambda i, *_: (0, 0)),
                pl.BlockSpec((1, OUT_FEATURES), lambda i, *_: (0, 0)),
            ],
            out_specs=pl.BlockSpec((num_nodes, 1, OUT_FEATURES),
                                   lambda i, *_: (0, 0, 0)),
        )
        call = pl.pallas_call(
            rae_tree_kernel,
            out_shape=jax.ShapeDtypeStruct((num_nodes, 1, OUT_FEATURES),
                                           jnp.float32),
            grid_spec=grid_spec,
            compiler_params=pltpu.CompilerParams(
                dimension_semantics=("arbitrary",)),   # sequential tree walk
            cost_estimate=cost,
        )
        return jax.jit(call)

    def forward(left, right, is_leaf, inp, root):
        """Mirrors RAEScript.forward; returns the (512,) root embedding."""
        left = np.asarray(left)
        right = np.asarray(right)
        is_leaf = np.asarray(is_leaf)

        # Host-side post-order of the *internal* nodes of the subtree at root
        # (this is the data-dependent recursion of the PyTorch module).
        post = []
        stack = [(int(root), False)]
        while stack:
            n, expanded = stack.pop()
            if bool(is_leaf[n]):
                continue
            if expanded:
                post.append(n)
            else:
                stack.append((n, True))
                stack.append((int(right[n]), False))
                stack.append((int(left[n]), False))

        if not post:                               # root is a leaf
            return jnp.asarray(inp[int(root)], jnp.float32)

        nodes = np.asarray(post, dtype=np.int32)
        lkids = left.astype(np.int32)[nodes]       # never -1 (internal only)
        rkids = right.astype(np.int32)[nodes]

        num_nodes = int(inp.shape[0])
        call = build(num_nodes, len(post))
        inp3 = jnp.asarray(inp, jnp.float32).reshape(num_nodes, 1, OUT_FEATURES)
        emb = call(jnp.asarray(nodes), jnp.asarray(lkids), jnp.asarray(rkids),
                   inp3, wtop, wbot, bias)
        return emb[int(root), 0, :]

    return forward, wtop, wbot, bias


# ------------------------------- references ---------------------------------
def rae_forward_ref_bf16(left, right, is_leaf, inp, root, wtop, wbot, bias):
    """Same math as the kernel (bf16 weights, f32 accum/epilogue)."""
    if bool(is_leaf[root]):
        return jnp.asarray(inp[root], jnp.float32)
    a = rae_forward_ref_bf16(left, right, is_leaf, inp, int(left[root]),
                             wtop, wbot, bias)
    b = rae_forward_ref_bf16(left, right, is_leaf, inp, int(right[root]),
                             wtop, wbot, bias)
    ea = jnp.dot(a.reshape(1, OUT_FEATURES).astype(jnp.bfloat16), wtop,
                 preferred_element_type=jnp.float32)
    eb = jnp.dot(b.reshape(1, OUT_FEATURES).astype(jnp.bfloat16), wbot,
                 preferred_element_type=jnp.float32)
    return jnp.tanh(ea + eb + bias).reshape(OUT_FEATURES)


def rae_forward_ref_f32(left, right, is_leaf, inp, root, w_t, bias):
    """Original full-f32 module semantics (loose sanity check)."""
    if bool(is_leaf[root]):
        return jnp.asarray(inp[root], jnp.float32)
    a = rae_forward_ref_f32(left, right, is_leaf, inp, int(left[root]), w_t, bias)
    b = rae_forward_ref_f32(left, right, is_leaf, inp, int(right[root]), w_t, bias)
    x = jnp.concatenate([a, b]).reshape(1, IN_FEATURES)
    return jnp.tanh(x @ w_t + bias).reshape(OUT_FEATURES)


# ----------------------------------- main ------------------------------------
if __name__ == "__main__":
    key = jax.random.PRNGKey(0)
    k_w, k_b, k_inp = jax.random.split(key, 3)

    # Deterministic nn.Linear(1024, 512) init: U(-1/sqrt(in), 1/sqrt(in))
    bound = 1.0 / np.sqrt(IN_FEATURES)
    W = jax.random.uniform(k_w, (OUT_FEATURES, IN_FEATURES),
                           jnp.float32, -bound, bound)
    b = jax.random.uniform(k_b, (OUT_FEATURES,), jnp.float32, -bound, bound)

    # Small complete binary tree with 7 nodes (root=0, leaves=3..6).
    num_nodes = 7
    left = np.array([1, 3, 5, -1, -1, -1, -1], dtype=np.int32)
    right = np.array([2, 4, 6, -1, -1, -1, -1], dtype=np.int32)
    is_leaf = np.array([0, 0, 0, 1, 1, 1, 1], dtype=np.int32)
    inp = jax.random.normal(k_inp, (num_nodes, OUT_FEATURES), jnp.float32)

    forward, wtop, wbot, bias = make_rae_tree_forward(W, b)
    out = jax.block_until_ready(forward(left, right, is_leaf, inp, root=0))
    assert out.shape == (OUT_FEATURES,)

    # Exact-math reference (bf16 weights, f32 accumulation) -- tight tolerance.
    ref = rae_forward_ref_bf16(left, right, is_leaf, inp, 0, wtop, wbot, bias)
    np.testing.assert_allclose(np.asarray(out), np.asarray(ref),
                               rtol=1e-3, atol=1e-3)

    # Original full-f32 module semantics -- loose tolerance (bf16 weights).
    ref_f32 = rae_forward_ref_f32(left, right, is_leaf, inp, 0,
                                  jnp.asarray(W.T), b.reshape(1, OUT_FEATURES))
    np.testing.assert_allclose(np.asarray(out), np.asarray(ref_f32),
                               rtol=0, atol=5e-2)

    print("KERNEL_OK")
</pallas_src>

<mosaic_0001>
module attributes {stable_mosaic.version = 11 : i64} {
  func.func @rae_tree_kernel(%arg0: i32, %arg1: memref<3xi32, #tpu.memory_space<smem>>, %arg2: memref<3xi32, #tpu.memory_space<smem>>, %arg3: memref<3xi32, #tpu.memory_space<smem>>, %arg4: memref<7x1x512xf32, #tpu.memory_space<vmem>>, %arg5: memref<512x512xbf16, #tpu.memory_space<vmem>>, %arg6: memref<512x512xbf16, #tpu.memory_space<vmem>>, %arg7: memref<1x512xf32, #tpu.memory_space<vmem>>, %arg8: memref<7x1x512xf32, #tpu.memory_space<vmem>>) attributes {dimension_semantics = [#tpu.dimension_semantics<arbitrary>], iteration_bounds = array<i64: 3>, scalar_prefetch = 3 : i64, scratch_operands = 0 : i64, tpu.core_type = #tpu.core_type<tc>, window_params = [{pipeline_mode = #tpu.pipeline_mode<synchronous>, transform_indices = @transform_0, window_bounds = array<i64: 7, 1, 512>}, {pipeline_mode = #tpu.pipeline_mode<synchronous>, transform_indices = @transform_1, window_bounds = array<i64: 512, 512>}, {pipeline_mode = #tpu.pipeline_mode<synchronous>, transform_indices = @transform_2, window_bounds = array<i64: 512, 512>}, {pipeline_mode = #tpu.pipeline_mode<synchronous>, transform_indices = @transform_3, window_bounds = array<i64: 1, 512>}, {pipeline_mode = #tpu.pipeline_mode<synchronous>, transform_indices = @transform_4, window_bounds = array<i64: 7, 1, 512>}]} {
    %c0_i32 = arith.constant 0 : i32
    %0 = arith.cmpi eq, %arg0, %c0_i32 : i32
    %1 = arith.extui %0 : i1 to i32
    %c0_i32_0 = arith.constant 0 : i32
    %2 = arith.cmpi ne, %1, %c0_i32_0 : i32
    scf.if %2 {
      %c0_13 = arith.constant 0 : index
      %c0_14 = arith.constant 0 : index
      %c0_15 = arith.constant 0 : index
      %29 = vector.load %arg4[%c0_13, %c0_14, %c0_15] : memref<7x1x512xf32, #tpu.memory_space<vmem>>, vector<7x1x512xf32>
      %c0_16 = arith.constant 0 : index
      %c0_17 = arith.constant 0 : index
      %c0_18 = arith.constant 0 : index
      %30 = vector.load %arg8[%c0_16, %c0_17, %c0_18] : memref<7x1x512xf32, #tpu.memory_space<vmem>>, vector<7x1x512xf32>
      tpu.vector_store %arg8[%c0_16, %c0_17, %c0_18], %29 {strides = array<i32>} : memref<7x1x512xf32, #tpu.memory_space<vmem>>, vector<7x1x512xf32>,
    } else {
    }
    %3 = arith.index_cast %arg0 : i32 to index
    %4 = memref.load %arg1[%3] : memref<3xi32, #tpu.memory_space<smem>>
    %5 = arith.index_cast %arg0 : i32 to index
    %6 = memref.load %arg2[%5] : memref<3xi32, #tpu.memory_space<smem>>
    %7 = arith.index_cast %6 : i32 to index
    %c0 = arith.constant 0 : index
    %c0_1 = arith.constant 0 : index
    %8 = vector.load %arg8[%7, %c0, %c0_1] : memref<7x1x512xf32, #tpu.memory_space<vmem>>, vector<1x1x512xf32>
    %9 = vector.shape_cast %8 : vector<1x1x512xf32> to vector<1x512xf32>
    %10 = arith.index_cast %arg0 : i32 to index
    %11 = memref.load %arg3[%10] : memref<3xi32, #tpu.memory_space<smem>>
    %12 = arith.index_cast %11 : i32 to index
    %c0_2 = arith.constant 0 : index
    %c0_3 = arith.constant 0 : index
    %13 = vector.load %arg8[%12, %c0_2, %c0_3] : memref<7x1x512xf32, #tpu.memory_space<vmem>>, vector<1x1x512xf32>
    %14 = vector.shape_cast %13 : vector<1x1x512xf32> to vector<1x512xf32>
    %15 = arith.truncf %9 : vector<1x512xf32> to vector<1x512xbf16>
    %c0_4 = arith.constant 0 : index
    %c0_5 = arith.constant 0 : index
    %16 = vector.load %arg5[%c0_4, %c0_5] : memref<512x512xbf16, #tpu.memory_space<vmem>>, vector<512x512xbf16>
    %cst = arith.constant dense<0.000000e+00> : vector<1x512xf32>
    %17 = tpu.matmul %15, %16, %cst {dimension_numbers = #tpu.dot_dimension_numbers<[1], [0], [0], [1], [0, 0, 1, 1], [], []>} : vector<1x512xbf16>, vector<512x512xbf16>, vector<1x512xf32> -> vector<1x512xf32>
    %18 = arith.truncf %14 : vector<1x512xf32> to vector<1x512xbf16>
    %c0_6 = arith.constant 0 : index
    %c0_7 = arith.constant 0 : index
    %19 = vector.load %arg6[%c0_6, %c0_7] : memref<512x512xbf16, #tpu.memory_space<vmem>>, vector<512x512xbf16>
    %cst_8 = arith.constant dense<0.000000e+00> : vector<1x512xf32>
    %20 = tpu.matmul %18, %19, %cst_8 {dimension_numbers = #tpu.dot_dimension_numbers<[1], [0], [0], [1], [0, 0, 1, 1], [], []>} : vector<1x512xbf16>, vector<512x512xbf16>, vector<1x512xf32> -> vector<1x512xf32>
    %21 = arith.addf %17, %20 : vector<1x512xf32>
    %c0_9 = arith.constant 0 : index
    %c0_10 = arith.constant 0 : index
    %22 = vector.load %arg7[%c0_9, %c0_10] : memref<1x512xf32, #tpu.memory_space<vmem>>, vector<1x512xf32>
    %23 = arith.addf %21, %22 : vector<1x512xf32>
    %24 = math.tanh %23 : vector<1x512xf32>
    %25 = arith.index_cast %4 : i32 to index
    %c0_11 = arith.constant 0 : index
    %c0_12 = arith.constant 0 : index
    %26 = vector.load %arg8[%25, %c0_11, %c0_12] : memref<7x1x512xf32, #tpu.memory_space<vmem>>, vector<1x1x512xf32>
    %27 = vector.shape_cast %26 : vector<1x1x512xf32> to vector<1x512xf32>
    %28 = vector.shape_cast %24 : vector<1x512xf32> to vector<1x1x512xf32>
    tpu.vector_store %arg8[%25, %c0_11, %c0_12], %28 {strides = array<i32>} : memref<7x1x512xf32, #tpu.memory_space<vmem>>, vector<1x1x512xf32>,
    return
  }
  func.func @transform_0(%arg0: i32, %arg1: memref<3xi32, #tpu.memory_space<smem>>, %arg2: memref<3xi32, #tpu.memory_space<smem>>, %arg3: memref<3xi32, #tpu.memory_space<smem>>) -> (i32, i32, i32) {
    %c0_i32 = arith.constant 0 : i32
    %c0_i32_0 = arith.constant 0 : i32
    %c0_i32_1 = arith.constant 0 : i32
    %c0_i32_2 = arith.constant 0 : i32
    return %c0_i32, %c0_i32_0, %c0_i32_1 : i32, i32, i32
  }
  func.func @transform_1(%arg0: i32, %arg1: memref<3xi32, #tpu.memory_space<smem>>, %arg2: memref<3xi32, #tpu.memory_space<smem>>, %arg3: memref<3xi32, #tpu.memory_space<smem>>) -> (i32, i32) {
    %c0_i32 = arith.constant 0 : i32
    %c0_i32_0 = arith.constant 0 : i32
    %c0_i32_1 = arith.constant 0 : i32
    return %c0_i32, %c0_i32_0 : i32, i32
  }
  func.func @transform_2(%arg0: i32, %arg1: memref<3xi32, #tpu.memory_space<smem>>, %arg2: memref<3xi32, #tpu.memory_space<smem>>, %arg3: memref<3xi32, #tpu.memory_space<smem>>) -> (i32, i32) {
    %c0_i32 = arith.constant 0 : i32
    %c0_i32_0 = arith.constant 0 : i32
    %c0_i32_1 = arith.constant 0 : i32
    return %c0_i32, %c0_i32_0 : i32, i32
  }
  func.func @transform_3(%arg0: i32, %arg1: memref<3xi32, #tpu.memory_space<smem>>, %arg2: memref<3xi32, #tpu.memory_space<smem>>, %arg3: memref<3xi32, #tpu.memory_space<smem>>) -> (i32, i32) {
    %c0_i32 = arith.constant 0 : i32
    %c0_i32_0 = arith.constant 0 : i32
    %c0_i32_1 = arith.constant 0 : i32
    return %c0_i32, %c0_i32_0 : i32, i32
  }
  func.func @transform_4(%arg0: i32, %arg1: memref<3xi32, #tpu.memory_space<smem>>, %arg2: memref<3xi32, #tpu.memory_space<smem>>, %arg3: memref<3xi32, #tpu.memory_space<smem>>) -> (i32, i32, i32) {
    %c0_i32 = arith.constant 0 : i32
    %c0_i32_0 = arith.constant 0 : i32
    %c0_i32_1 = arith.constant 0 : i32
    %c0_i32_2 = arith.constant 0 : i32
    return %c0_i32, %c0_i32_0, %c0_i32_1 : i32, i32, i32
  }
}

</mosaic_0001>

<llo_original>
// kernel: tpu_custom_call.1
$region0: #{tpu_custom_call.1}
  #allocation0 [shape = 'u32[]', space=smem, size = 0x4, offset = 0x4, fixed_abs, tag = 'smem constant byte address 0x4 - core index']
  #allocation1 [shape = 'u32[72,128]{1,0:T(1,128)}', space=vmem, size = 0x9000, scoped, tag = 'internal scratch']
  #allocation2 [shape = 's32[1]{0}', space=sflag, size = 0x4, scoped, tag = 'scoped memory for tpu_custom_call.1']
  #allocation3 [shape = 'u8[512]{0}', space=smem, size = 0x200, scoped, tag = 'prefetched SMEM operand 0']
  #allocation4 [shape = 'u8[512]{0}', space=smem, size = 0x200, scoped, tag = 'prefetched SMEM operand 1']
  #allocation5 [shape = 'u8[512]{0}', space=smem, size = 0x200, scoped, tag = 'prefetched SMEM operand 2']
  %s0 = inlined_call_operand.hbm [shape: s32[3], index: 0, kind: input, shape index: {}]
  %s1 = inlined_call_operand.hbm [shape: s32[3], index: 1, kind: input, shape index: {}]
  %s2 = inlined_call_operand.vmem [shape: s32[3], index: 2, kind: input, shape index: {}]
  %s3 = inlined_call_operand.hbm [shape: f32[7,1,512], index: 3, kind: input, shape index: {}]
  %s4 = inlined_call_operand.hbm [shape: bf16[512,512], index: 4, kind: input, shape index: {}]
  %s5 = inlined_call_operand.hbm [shape: bf16[512,512], index: 5, kind: input, shape index: {}]
  %s6 = inlined_call_operand.vmem [shape: f32[1,512], index: 6, kind: input, shape index: {}]
  %s7 = inlined_call_operand.hbm [shape: f32[7,1,512], index: 7, kind: output, shape index: {}]
  %s8 = sld [smem:[#allocation0]]
  $region65: #{tpu_custom_call.1} parent=0
    _
  %s10 = ssub.s32 1, %s8
  %s11 = scalar_select 0, %s10, %s8
  %s13 = sshll.u32 %s0, 4
  %s14 = int_to_ptr.hbm [resolvable:$true] %s13
  %16 = dma.hbm_to_smem %s14, 16, [#allocation3], [#allocation2]
  %s18 = sshll.u32 %s1, 4
  %s19 = int_to_ptr.hbm [resolvable:$true] %s18
  %21 = dma.hbm_to_smem %s19, 16, [#allocation4], [#allocation2]
  %s23 = sshll.u32 %s2, 4
  %s24 = int_to_ptr.vmem [resolvable:$true] %s23
  %26 = dma.vmem_to_smem %s24, 16, [#allocation5], [#allocation2]
  %28 = dma.done [#allocation2], 48
  %29 = sfence
  $region1: #{tpu_custom_call.1} parent=0
    #allocation6 [shape = 'u8[14336]{0}', space=vmem, size = 0x3800, scoped, tag = 'input window, operand 3, single buffered']
    #allocation7 [shape = 's32[2]{0}', space=sflag, size = 0x8, scoped, tag = 'scoped memory for tpu_custom_call.1']
    #allocation8 [shape = 's32[2]{0}', space=sflag, size = 0x8, scoped, tag = 'scoped memory for tpu_custom_call.1']
    #allocation9 [shape = 'u8[524288]{0}', space=vmem, size = 0x80000, scoped, tag = 'input window, operand 4, single buffered']
    #allocation10 [shape = 's32[1]{0}', space=sflag, size = 0x4, scoped, tag = 'scoped memory for tpu_custom_call.1']
    #allocation11 [shape = 'u8[524288]{0}', space=vmem, size = 0x80000, scoped, tag = 'input window, operand 5, single buffered']
    #allocation12 [shape = 'u8[14336]{0}', space=vmem, size = 0x3800, scoped, tag = 'output window, operand 0, single buffered']
    %30 = vsyncpa [#allocation7], 0
    %31 = vsyncpa [#allocation10], 0
    %32 = vsyncpa [#allocation8], 0
    loop: start=0, step=1, limit=5
    $region2: #{tpu_custom_call.1} parent=1 // loop_pre_header
      _
    $region3: #{tpu_custom_call.1} parent=1 // loop_header
      %s34 = sphi 0, %s38
      %p35 = scmp.ge.s32.totalorder %s34, 5
      %s42 = sphi 0, %s42
      %s44 = sphi 0, %s42
      %s45 = sphi 0, %s44
      %s59 = sphi 0, %s45
      %s63 = sphi 0, %s63
      %s65 = sphi 0, %s63
      %s66 = sphi 0, %s65
      %s80 = sphi 0, %s66
      %s84 = sphi 0, %s84
      %s86 = sphi 0, %s84
      %s87 = sphi 0, %s86
      %s101 = sphi 0, %s87
      %s105 = sphi 0, %s105
      %s107 = sphi 0, %s105
      %s108 = sphi 0, %s107
      %s122 = sphi 0, %s108
      %s126 = sphi 0, %s126
      %s128 = sphi 0, %s126
      %s129 = sphi 0, %s128
      %s143 = sphi 0, %s129
    $region4: #{tpu_custom_call.1} parent=1 // loop_header_branch
      %37 = sbr.rel (%p35) target = $region8
    $region5: #{tpu_custom_call.1} parent=1 // loop_body
      %s39 = ssub.s32 %s34, 1
      %s40 = ssub.s32 %s34, 2
      %s41 = sadd.s32 %s34, 1
      %s43 = sadd.s32 %s42, 1
      %p46 = scmp.eq.s32.totalorder %s34, 2
      %p47 = scmp.ne.s32.totalorder %s42, %s44
      %p48 = scmp.eq.s32.totalorder %s34, 0
      %p49 = por %p47, %p48
      %p50 = scmp.ne.s32.totalorder %s42, %s44
      %p51 = scmp.eq.s32.totalorder %s39, 2
      %p52 = por %p50, %p51
      %p53 = scmp.ne.s32.totalorder %s44, %s45
      %p54 = scmp.eq.s32.totalorder %s39, 0
      %p55 = por %p53, %p54
      %p56 = scmp.ne.s32.totalorder %s44, %s45
      %p57 = scmp.eq.s32.totalorder %s40, 2
      %p58 = por %p56, %p57
      %p60 = scmp.ne.s32.totalorder %s45, %s59
      %p61 = scmp.eq.s32.totalorder %s40, 0
      %p62 = por %p60, %p61
      %s64 = sadd.s32 %s63, 1
      %p67 = scmp.eq.s32.totalorder %s34, 2
      %p68 = scmp.ne.s32.totalorder %s63, %s65
      %p69 = scmp.eq.s32.totalorder %s34, 0
      %p70 = por %p68, %p69
      %p71 = scmp.ne.s32.totalorder %s63, %s65
      %p72 = scmp.eq.s32.totalorder %s39, 2
      %p73 = por %p71, %p72
      %p74 = scmp.ne.s32.totalorder %s65, %s66
      %p75 = scmp.eq.s32.totalorder %s39, 0
      %p76 = por %p74, %p75
      %p77 = scmp.ne.s32.totalorder %s65, %s66
      %p78 = scmp.eq.s32.totalorder %s40, 2
      %p79 = por %p77, %p78
      %p81 = scmp.ne.s32.totalorder %s66, %s80
      %p82 = scmp.eq.s32.totalorder %s40, 0
      %p83 = por %p81, %p82
      %s85 = sadd.s32 %s84, 1
      %p88 = scmp.eq.s32.totalorder %s34, 2
      %p89 = scmp.ne.s32.totalorder %s84, %s86
      %p90 = scmp.eq.s32.totalorder %s34, 0
      %p91 = por %p89, %p90
      %p92 = scmp.ne.s32.totalorder %s84, %s86
      %p93 = scmp.eq.s32.totalorder %s39, 2
      %p94 = por %p92, %p93
      %p95 = scmp.ne.s32.totalorder %s86, %s87
      %p96 = scmp.eq.s32.totalorder %s39, 0
      %p97 = por %p95, %p96
      %p98 = scmp.ne.s32.totalorder %s86, %s87
      %p99 = scmp.eq.s32.totalorder %s40, 2
      %p100 = por %p98, %p99
      %p102 = scmp.ne.s32.totalorder %s87, %s101
      %p103 = scmp.eq.s32.totalorder %s40, 0
      %p104 = por %p102, %p103
      %s106 = sadd.s32 %s105, 1
      %p109 = scmp.eq.s32.totalorder %s34, 2
      %p110 = scmp.ne.s32.totalorder %s105, %s107
      %p111 = scmp.eq.s32.totalorder %s34, 0
      %p112 = por %p110, %p111
      %p113 = scmp.ne.s32.totalorder %s105, %s107
      %p114 = scmp.eq.s32.totalorder %s39, 2
      %p115 = por %p113, %p114
      %p116 = scmp.ne.s32.totalorder %s107, %s108
      %p117 = scmp.eq.s32.totalorder %s39, 0
      %p118 = por %p116, %p117
      %p119 = scmp.ne.s32.totalorder %s107, %s108
      %p120 = scmp.eq.s32.totalorder %s40, 2
      %p121 = por %p119, %p120
      %p123 = scmp.ne.s32.totalorder %s108, %s122
      %p124 = scmp.eq.s32.totalorder %s40, 0
      %p125 = por %p123, %p124
      %s127 = sadd.s32 %s126, 1
      %p130 = scmp.eq.s32.totalorder %s34, 2
      %p131 = scmp.ne.s32.totalorder %s126, %s128
      %p132 = scmp.eq.s32.totalorder %s34, 0
      %p133 = por %p131, %p132
      %p134 = scmp.ne.s32.totalorder %s126, %s128
      %p135 = scmp.eq.s32.totalorder %s39, 2
      %p136 = por %p134, %p135
      %p137 = scmp.ne.s32.totalorder %s128, %s129
      %p138 = scmp.eq.s32.totalorder %s39, 0
      %p139 = por %p137, %p138
      %p140 = scmp.ne.s32.totalorder %s128, %s129
      %p141 = scmp.eq.s32.totalorder %s40, 2
      %p142 = por %p140, %p141
      %p144 = scmp.ne.s32.totalorder %s129, %s143
      %p145 = scmp.eq.s32.totalorder %s40, 0
      %p146 = por %p144, %p145
      %p147 = scmp.le.s32.totalorder 1, %s34
      %p148 = scmp.lt.s32.totalorder %s34, 4
      %p149 = pnand %p147, %p148
      %p150 = pneg %p149
      // Predicated region
      $region9: #{tpu_custom_call.1} parent=5 // pred_check
        _
      $region10: #{tpu_custom_call.1} parent=5 // pred_check_branch
        %152 = sbr.rel (%p149) target = $region12
      $region11: #{tpu_custom_call.1} parent=5 // pred_region
        %s153 = ssub.s32 %s34, 1
        // Predicated region
        $region13: #{tpu_custom_call.1} parent=11 // pred_check
          %p154 = pneg %p55
        $region14: #{tpu_custom_call.1} parent=11 // pred_check_branch
          %156 = sbr.rel (%p154) target = $region16
        $region15: #{tpu_custom_call.1} parent=11 // pred_region
          %158 = vsyncadd [#allocation7], 0
          %s159 = sshll.u32 %s3, 4
          %s160 = int_to_ptr.hbm [resolvable:$true] %s159
          %s161 = sshll.u32 [#allocation6], 4
          %s162 = int_to_ptr.vmem [resolvable:$true] %s161
          %167 = dma.hbm_to_vmem [thread:$0]  %s160, 448, %s162, [#allocation7], 64, 64, 4
        $region16: #{tpu_custom_call.1} parent=11 // pred_fallthru
          _
        // Predicated region
        $region17: #{tpu_custom_call.1} parent=11 // pred_check
          %p168 = pneg %p76
        $region18: #{tpu_custom_call.1} parent=11 // pred_check_branch
          %170 = sbr.rel (%p168) target = $region20
        $region19: #{tpu_custom_call.1} parent=11 // pred_region
          %172 = vsyncadd [#allocation10], 0
          %s173 = sshll.u32 %s4, 4
          %s174 = int_to_ptr.hbm [resolvable:$true] %s173
          %s175 = sshll.u32 [#allocation9], 4
          %s176 = int_to_ptr.vmem [resolvable:$true] %s175
          %181 = dma.hbm_to_vmem [thread:$0]  %s174, 16384, %s176, [#allocation10], 256, 256, 16
        $region20: #{tpu_custom_call.1} parent=11 // pred_fallthru
          _
        // Predicated region
        $region21: #{tpu_custom_call.1} parent=11 // pred_check
          %p182 = pneg %p97
        $region22: #{tpu_custom_call.1} parent=11 // pred_check_branch
          %184 = sbr.rel (%p182) target = $region24
        $region23: #{tpu_custom_call.1} parent=11 // pred_region
          %186 = vsyncadd [#allocation10], 0
          %s187 = sshll.u32 %s5, 4
          %s188 = int_to_ptr.hbm [resolvable:$true] %s187
          %s189 = sshll.u32 [#allocation11], 4
          %s190 = int_to_ptr.vmem [resolvable:$true] %s189
          %195 = dma.hbm_to_vmem [thread:$0]  %s188, 16384, %s190, [#allocation10], 256, 256, 16
        $region24: #{tpu_custom_call.1} parent=11 // pred_fallthru
          _
        // Predicated region
        $region25: #{tpu_custom_call.1} parent=11 // pred_check
          %p196 = pneg %p118
        $region26: #{tpu_custom_call.1} parent=11 // pred_check_branch
          %198 = sbr.rel (%p196) target = $region28
        $region27: #{tpu_custom_call.1} parent=11 // pred_region
          _
        $region28: #{tpu_custom_call.1} parent=11 // pred_fallthru
          _
      $region12: #{tpu_custom_call.1} parent=5 // pred_fallthru
        _
      %p199 = scmp.lt.s32.totalorder %s34, 3
      // Predicated region
      $region29: #{tpu_custom_call.1} parent=5 // pred_check
        %p200 = pneg %p199
      $region30: #{tpu_custom_call.1} parent=5 // pred_check_branch
        %202 = sbr.rel (%p200) target = $region32
      $region31: #{tpu_custom_call.1} parent=5 // pred_region
        _
      $region32: #{tpu_custom_call.1} parent=5 // pred_fallthru
        _
      %p203 = scmp.le.s32.totalorder 1, %s34
      %p204 = scmp.lt.s32.totalorder %s34, 4
      %p205 = pnand %p203, %p204
      %p206 = pneg %p205
      // Predicated region
      $region33: #{tpu_custom_call.1} parent=5 // pred_check
        _
      $region34: #{tpu_custom_call.1} parent=5 // pred_check_branch
        %208 = sbr.rel (%p205) target = $region36
      $region35: #{tpu_custom_call.1} parent=5 // pred_region
        %s209 = ssub.s32 %s34, 1
        // Predicated region
        $region37: #{tpu_custom_call.1} parent=35 // pred_check
          %p210 = pneg %p55
        $region38: #{tpu_custom_call.1} parent=35 // pred_check_branch
          %212 = sbr.rel (%p210) target = $region40
        $region39: #{tpu_custom_call.1} parent=35 // pred_region
          %214 = dma.done [#allocation7], 448
        $region40: #{tpu_custom_call.1} parent=35 // pred_fallthru
          _
        // Predicated region
        $region41: #{tpu_custom_call.1} parent=35 // pred_check
          %p215 = pneg %p76
        $region42: #{tpu_custom_call.1} parent=35 // pred_check_branch
          %217 = sbr.rel (%p215) target = $region44
        $region43: #{tpu_custom_call.1} parent=35 // pred_region
          %219 = dma.done [#allocation10], 16384
        $region44: #{tpu_custom_call.1} parent=35 // pred_fallthru
          _
        // Predicated region
        $region45: #{tpu_custom_call.1} parent=35 // pred_check
          %p220 = pneg %p97
        $region46: #{tpu_custom_call.1} parent=35 // pred_check_branch
          %222 = sbr.rel (%p220) target = $region48
        $region47: #{tpu_custom_call.1} parent=35 // pred_region
          %224 = dma.done [#allocation10], 16384
        $region48: #{tpu_custom_call.1} parent=35 // pred_fallthru
          _
        %p225 = pneg %p55
        %p226 = pneg %p52
        %p227 = pneg %p76
        %p228 = pneg %p73
        %p229 = pneg %p97
        %p230 = pneg %p94
        %p231 = pneg %p118
        %p232 = pneg %p115
        %p233 = pneg %p139
        %p234 = pneg %p136
        %p235 = scmp.eq.s32.totalorder %s39, 0
        // Predicated region
        $region49: #{tpu_custom_call.1} parent=35 // pred_check
          %p236 = pneg %p235
        $region50: #{tpu_custom_call.1} parent=35 // pred_check_branch
          %238 = sbr.rel (%p236) target = $region52
        $region51: #{tpu_custom_call.1} parent=35 // pred_region
          %v239 = vld [vmem:[#allocation6] sm:$0xf]
          %v240 = vld [vmem:[#allocation6 + $0x4] sm:$0xf]
          %v241 = vld [vmem:[#allocation6 + $0x8] sm:$0xf]
          %v242 = vld [vmem:[#allocation6 + $0xc] sm:$0xf]
          %v243 = vld [vmem:[#allocation6 + $0x10] sm:$0xf]
          %v244 = vld [vmem:[#allocation6 + $0x14] sm:$0xf]
          %v245 = vld [vmem:[#allocation6 + $0x18] sm:$0xf]
          %v246 = vlaneseq
          %vm247 = vcmp.ge.s32.totalorder %v246, 0
          %vm248 = vcmp.lt.s32.totalorder %v246, 512
          %vm249 = vmand %vm247, %vm248
          %250 = vst.msk [vmem:[#allocation12] sm:$0xf] %vm249, %v239
          %251 = vst.msk [vmem:[#allocation12 + $0x4] sm:$0xf] %vm249, %v240
          %252 = vst.msk [vmem:[#allocation12 + $0x8] sm:$0xf] %vm249, %v241
          %253 = vst.msk [vmem:[#allocation12 + $0xc] sm:$0xf] %vm249, %v242
          %254 = vst.msk [vmem:[#allocation12 + $0x10] sm:$0xf] %vm249, %v243
          %255 = vst.msk [vmem:[#allocation12 + $0x14] sm:$0xf] %vm249, %v244
          %256 = vst.msk [vmem:[#allocation12 + $0x18] sm:$0xf] %vm249, %v245
        $region52: #{tpu_custom_call.1} parent=35 // pred_fallthru
          _
        %s257 = sld [smem:[#allocation3 + %s39]]
        %s258 = sld [smem:[#allocation4 + %s39]]
        %s259 = smul.u32 %s258, 4
        %s260 = scalar_lea.vmem [#allocation12], %s259
        %v261 = vld [vmem:[%s260] sm:$0xf]
        %s262 = sld [smem:[#allocation5 + %s39]]
        %s263 = smul.u32 %s262, 4
        %s264 = scalar_lea.vmem [#allocation12], %s263
        %v265 = vld [vmem:[%s264] sm:$0xf]
        %v267 = vperm.slane %v261, 0
        %v268 = vperm.slane %v261, 1
        %v269 = vperm.slane %v261, 2
        %v270 = vperm.slane %v261, 3
        %v275 = vpack.c.bf16 %v267, %v267
        %v276 = vpack.c.bf16 %v268, %v268
        %v277 = vpack.c.bf16 %v269, %v269
        %v278 = vpack.c.bf16 %v270, %v270
        %v279 = vld [vmem:[#allocation9] sm:$0xff]
        %v280 = vld [vmem:[#allocation9 + $0x8] sm:$0xff]
        %v281 = vld [vmem:[#allocation9 + $0x10] sm:$0xff]
        %v282 = vld [vmem:[#allocation9 + $0x18] sm:$0xff]
        %v283 = vld [vmem:[#allocation9 + $0x20] sm:$0xff]
        %v284 = vld [vmem:[#allocation9 + $0x28] sm:$0xff]
        %v285 = vld [vmem:[#allocation9 + $0x30] sm:$0xff]
        %v286 = vld [vmem:[#allocation9 + $0x38] sm:$0xff]
        %v287 = vld [vmem:[#allocation9 + $0x40] sm:$0xff]
        %v288 = vld [vmem:[#allocation9 + $0x48] sm:$0xff]
        %v289 = vld [vmem:[#allocation9 + $0x50] sm:$0xff]
        %v290 = vld [vmem:[#allocation9 + $0x58] sm:$0xff]
        %v291 = vld [vmem:[#allocation9 + $0x60] sm:$0xff]
        %v292 = vld [vmem:[#allocation9 + $0x68] sm:$0xff]
        %v293 = vld [vmem:[#allocation9 + $0x70] sm:$0xff]
        %v294 = vld [vmem:[#allocation9 + $0x78] sm:$0xff]
        %v295 = vld [vmem:[#allocation9 + $0x80] sm:$0xff]
        %v296 = vld [vmem:[#allocation9 + $0x88] sm:$0xff]
        %v297 = vld [vmem:[#allocation9 + $0x90] sm:$0xff]
        %v298 = vld [vmem:[#allocation9 + $0x98] sm:$0xff]
        %v299 = vld [vmem:[#allocation9 + $0xa0] sm:$0xff]
        %v300 = vld [vmem:[#allocation9 + $0xa8] sm:$0xff]
        %v301 = vld [vmem:[#allocation9 + $0xb0] sm:$0xff]
        %v302 = vld [vmem:[#allocation9 + $0xb8] sm:$0xff]
        %v303 = vld [vmem:[#allocation9 + $0xc0] sm:$0xff]
        %v304 = vld [vmem:[#allocation9 + $0xc8] sm:$0xff]
        %v305 = vld [vmem:[#allocation9 + $0xd0] sm:$0xff]
        %v306 = vld [vmem:[#allocation9 + $0xd8] sm:$0xff]
        %v307 = vld [vmem:[#allocation9 + $0xe0] sm:$0xff]
        %v308 = vld [vmem:[#allocation9 + $0xe8] sm:$0xff]
        %v309 = vld [vmem:[#allocation9 + $0xf0] sm:$0xff]
        %v310 = vld [vmem:[#allocation9 + $0xf8] sm:$0xff]
        %v311 = vld [vmem:[#allocation9 + $0x100] sm:$0xff]
        %v312 = vld [vmem:[#allocation9 + $0x108] sm:$0xff]
        %v313 = vld [vmem:[#allocation9 + $0x110] sm:$0xff]
        %v314 = vld [vmem:[#allocation9 + $0x118] sm:$0xff]
        %v315 = vld [vmem:[#allocation9 + $0x120] sm:$0xff]
        %v316 = vld [vmem:[#allocation9 + $0x128] sm:$0xff]
        %v317 = vld [vmem:[#allocation9 + $0x130] sm:$0xff]
        %v318 = vld [vmem:[#allocation9 + $0x138] sm:$0xff]
        %v319 = vld [vmem:[#allocation9 + $0x140] sm:$0xff]
        %v320 = vld [vmem:[#allocation9 + $0x148] sm:$0xff]
        %v321 = vld [vmem:[#allocation9 + $0x150] sm:$0xff]
        %v322 = vld [vmem:[#allocation9 + $0x158] sm:$0xff]
        %v323 = vld [vmem:[#allocation9 + $0x160] sm:$0xff]
        %v324 = vld [vmem:[#allocation9 + $0x168] sm:$0xff]
        %v325 = vld [vmem:[#allocation9 + $0x170] sm:$0xff]
        %v326 = vld [vmem:[#allocation9 + $0x178] sm:$0xff]
        %v327 = vld [vmem:[#allocation9 + $0x180] sm:$0xff]
        %v328 = vld [vmem:[#allocation9 + $0x188] sm:$0xff]
        %v329 = vld [vmem:[#allocation9 + $0x190] sm:$0xff]
        %v330 = vld [vmem:[#allocation9 + $0x198] sm:$0xff]
        %v331 = vld [vmem:[#allocation9 + $0x1a0] sm:$0xff]
        %v332 = vld [vmem:[#allocation9 + $0x1a8] sm:$0xff]
        %v333 = vld [vmem:[#allocation9 + $0x1b0] sm:$0xff]
        %v334 = vld [vmem:[#allocation9 + $0x1b8] sm:$0xff]
        %v335 = vld [vmem:[#allocation9 + $0x1c0] sm:$0xff]
        %v336 = vld [vmem:[#allocation9 + $0x1c8] sm:$0xff]
        %v337 = vld [vmem:[#allocation9 + $0x1d0] sm:$0xff]
        %v338 = vld [vmem:[#allocation9 + $0x1d8] sm:$0xff]
        %v339 = vld [vmem:[#allocation9 + $0x1e0] sm:$0xff]
        %v340 = vld [vmem:[#allocation9 + $0x1e8] sm:$0xff]
        %v341 = vld [vmem:[#allocation9 + $0x1f0] sm:$0xff]
        %v342 = vld [vmem:[#allocation9 + $0x1f8] sm:$0xff]
        %v343 = vld [vmem:[#allocation9 + $0x200] sm:$0xff]
        %v344 = vld [vmem:[#allocation9 + $0x208] sm:$0xff]
        %v345 = vld [vmem:[#allocation9 + $0x210] sm:$0xff]
        %v346 = vld [vmem:[#allocation9 + $0x218] sm:$0xff]
        %v347 = vld [vmem:[#allocation9 + $0x220] sm:$0xff]
        %v348 = vld [vmem:[#allocation9 + $0x228] sm:$0xff]
        %v349 = vld [vmem:[#allocation9 + $0x230] sm:$0xff]
        %v350 = vld [vmem:[#allocation9 + $0x238] sm:$0xff]
        %v351 = vld [vmem:[#allocation9 + $0x240] sm:$0xff]
        %v352 = vld [vmem:[#allocation9 + $0x248] sm:$0xff]
        %v353 = vld [vmem:[#allocation9 + $0x250] sm:$0xff]
        %v354 = vld [vmem:[#allocation9 + $0x258] sm:$0xff]
        %v355 = vld [vmem:[#allocation9 + $0x260] sm:$0xff]
        %v356 = vld [vmem:[#allocation9 + $0x268] sm:$0xff]
        %v357 = vld [vmem:[#allocation9 + $0x270] sm:$0xff]
        %v358 = vld [vmem:[#allocation9 + $0x278] sm:$0xff]
        %v359 = vld [vmem:[#allocation9 + $0x280] sm:$0xff]
        %v360 = vld [vmem:[#allocation9 + $0x288] sm:$0xff]
        %v361 = vld [vmem:[#allocation9 + $0x290] sm:$0xff]
        %v362 = vld [vmem:[#allocation9 + $0x298] sm:$0xff]
        %v363 = vld [vmem:[#allocation9 + $0x2a0] sm:$0xff]
        %v364 = vld [vmem:[#allocation9 + $0x2a8] sm:$0xff]
        %v365 = vld [vmem:[#allocation9 + $0x2b0] sm:$0xff]
        %v366 = vld [vmem:[#allocation9 + $0x2b8] sm:$0xff]
        %v367 = vld [vmem:[#allocation9 + $0x2c0] sm:$0xff]
        %v368 = vld [vmem:[#allocation9 + $0x2c8] sm:$0xff]
        %v369 = vld [vmem:[#allocation9 + $0x2d0] sm:$0xff]
        %v370 = vld [vmem:[#allocation9 + $0x2d8] sm:$0xff]
        %v371 = vld [vmem:[#allocation9 + $0x2e0] sm:$0xff]
        %v372 = vld [vmem:[#allocation9 + $0x2e8] sm:$0xff]
        %v373 = vld [vmem:[#allocation9 + $0x2f0] sm:$0xff]
        %v374 = vld [vmem:[#allocation9 + $0x2f8] sm:$0xff]
        %v375 = vld [vmem:[#allocation9 + $0x300] sm:$0xff]
        %v376 = vld [vmem:[#allocation9 + $0x308] sm:$0xff]
        %v377 = vld [vmem:[#allocation9 + $0x310] sm:$0xff]
        %v378 = vld [vmem:[#allocation9 + $0x318] sm:$0xff]
        %v379 = vld [vmem:[#allocation9 + $0x320] sm:$0xff]
        %v380 = vld [vmem:[#allocation9 + $0x328] sm:$0xff]
        %v381 = vld [vmem:[#allocation9 + $0x330] sm:$0xff]
        %v382 = vld [vmem:[#allocation9 + $0x338] sm:$0xff]
        %v383 = vld [vmem:[#allocation9 + $0x340] sm:$0xff]
        %v384 = vld [vmem:[#allocation9 + $0x348] sm:$0xff]
        %v385 = vld [vmem:[#allocation9 + $0x350] sm:$0xff]
        %v386 = vld [vmem:[#allocation9 + $0x358] sm:$0xff]
        %v387 = vld [vmem:[#allocation9 + $0x360] sm:$0xff]
        %v388 = vld [vmem:[#allocation9 + $0x368] sm:$0xff]
        %v389 = vld [vmem:[#allocation9 + $0x370] sm:$0xff]
        %v390 = vld [vmem:[#allocation9 + $0x378] sm:$0xff]
        %v391 = vld [vmem:[#allocation9 + $0x380] sm:$0xff]
        %v392 = vld [vmem:[#allocation9 + $0x388] sm:$0xff]
        %v393 = vld [vmem:[#allocation9 + $0x390] sm:$0xff]
        %v394 = vld [vmem:[#allocation9 + $0x398] sm:$0xff]
        %v395 = vld [vmem:[#allocation9 + $0x3a0] sm:$0xff]
        %v396 = vld [vmem:[#allocation9 + $0x3a8] sm:$0xff]
        %v397 = vld [vmem:[#allocation9 + $0x3b0] sm:$0xff]
        %v398 = vld [vmem:[#allocation9 + $0x3b8] sm:$0xff]
        %v399 = vld [vmem:[#allocation9 + $0x3c0] sm:$0xff]
        %v400 = vld [vmem:[#allocation9 + $0x3c8] sm:$0xff]
        %v401 = vld [vmem:[#allocation9 + $0x3d0] sm:$0xff]
        %v402 = vld [vmem:[#allocation9 + $0x3d8] sm:$0xff]
        %v403 = vld [vmem:[#allocation9 + $0x3e0] sm:$0xff]
        %v404 = vld [vmem:[#allocation9 + $0x3e8] sm:$0xff]
        %v405 = vld [vmem:[#allocation9 + $0x3f0] sm:$0xff]
        %v406 = vld [vmem:[#allocation9 + $0x3f8] sm:$0xff]
        %v408 = vperm.slane %v265, 0
        %v409 = vperm.slane %v265, 1
        %v410 = vperm.slane %v265, 2
        %v411 = vperm.slane %v265, 3
        %v416 = vpack.c.bf16 %v408, %v408
        %v417 = vpack.c.bf16 %v409, %v409
        %v418 = vpack.c.bf16 %v410, %v410
        %v419 = vpack.c.bf16 %v411, %v411
        %v420 = vld [vmem:[#allocation11] sm:$0xff]
        %v421 = vld [vmem:[#allocation11 + $0x8] sm:$0xff]
        %v422 = vld [vmem:[#allocation11 + $0x10] sm:$0xff]
        %v423 = vld [vmem:[#allocation11 + $0x18] sm:$0xff]
        %v424 = vld [vmem:[#allocation11 + $0x20] sm:$0xff]
        %v425 = vld [vmem:[#allocation11 + $0x28] sm:$0xff]
        %v426 = vld [vmem:[#allocation11 + $0x30] sm:$0xff]
        %v427 = vld [vmem:[#allocation11 + $0x38] sm:$0xff]
        %v428 = vld [vmem:[#allocation11 + $0x40] sm:$0xff]
        %v429 = vld [vmem:[#allocation11 + $0x48] sm:$0xff]
        %v430 = vld [vmem:[#allocation11 + $0x50] sm:$0xff]
        %v431 = vld [vmem:[#allocation11 + $0x58] sm:$0xff]
        %v432 = vld [vmem:[#allocation11 + $0x60] sm:$0xff]
        %v433 = vld [vmem:[#allocation11 + $0x68] sm:$0xff]
        %v434 = vld [vmem:[#allocation11 + $0x70] sm:$0xff]
        %v435 = vld [vmem:[#allocation11 + $0x78] sm:$0xff]
        %v436 = vld [vmem:[#allocation11 + $0x80] sm:$0xff]
        %v437 = vld [vmem:[#allocation11 + $0x88] sm:$0xff]
        %v438 = vld [vmem:[#allocation11 + $0x90] sm:$0xff]
        %v439 = vld [vmem:[#allocation11 + $0x98] sm:$0xff]
        %v440 = vld [vmem:[#allocation11 + $0xa0] sm:$0xff]
        %v441 = vld [vmem:[#allocation11 + $0xa8] sm:$0xff]
        %v442 = vld [vmem:[#allocation11 + $0xb0] sm:$0xff]
        %v443 = vld [vmem:[#allocation11 + $0xb8] sm:$0xff]
        %v444 = vld [vmem:[#allocation11 + $0xc0] sm:$0xff]
        %v445 = vld [vmem:[#allocation11 + $0xc8] sm:$0xff]
        %v446 = vld [vmem:[#allocation11 + $0xd0] sm:$0xff]
        %v447 = vld [vmem:[#allocation11 + $0xd8] sm:$0xff]
        %v448 = vld [vmem:[#allocation11 + $0xe0] sm:$0xff]
        %v449 = vld [vmem:[#allocation11 + $0xe8] sm:$0xff]
        %v450 = vld [vmem:[#allocation11 + $0xf0] sm:$0xff]
        %v451 = vld [vmem:[#allocation11 + $0xf8] sm:$0xff]
        %v452 = vld [vmem:[#allocation11 + $0x100] sm:$0xff]
        %v453 = vld [vmem:[#allocation11 + $0x108] sm:$0xff]
        %v454 = vld [vmem:[#allocation11 + $0x110] sm:$0xff]
        %v455 = vld [vmem:[#allocation11 + $0x118] sm:$0xff]
        %v456 = vld [vmem:[#allocation11 + $0x120] sm:$0xff]
        %v457 = vld [vmem:[#allocation11 + $0x128] sm:$0xff]
        %v458 = vld [vmem:[#allocation11 + $0x130] sm:$0xff]
        %v459 = vld [vmem:[#allocation11 + $0x138] sm:$0xff]
        %v460 = vld [vmem:[#allocation11 + $0x140] sm:$0xff]
        %v461 = vld [vmem:[#allocation11 + $0x148] sm:$0xff]
        %v462 = vld [vmem:[#allocation11 + $0x150] sm:$0xff]
        %v463 = vld [vmem:[#allocation11 + $0x158] sm:$0xff]
        %v464 = vld [vmem:[#allocation11 + $0x160] sm:$0xff]
        %v465 = vld [vmem:[#allocation11 + $0x168] sm:$0xff]
        %v466 = vld [vmem:[#allocation11 + $0x170] sm:$0xff]
        %v467 = vld [vmem:[#allocation11 + $0x178] sm:$0xff]
        %v468 = vld [vmem:[#allocation11 + $0x180] sm:$0xff]
        %v469 = vld [vmem:[#allocation11 + $0x188] sm:$0xff]
        %v470 = vld [vmem:[#allocation11 + $0x190] sm:$0xff]
        %v471 = vld [vmem:[#allocation11 + $0x198] sm:$0xff]
        %v472 = vld [vmem:[#allocation11 + $0x1a0] sm:$0xff]
        %v473 = vld [vmem:[#allocation11 + $0x1a8] sm:$0xff]
        %v474 = vld [vmem:[#allocation11 + $0x1b0] sm:$0xff]
        %v475 = vld [vmem:[#allocation11 + $0x1b8] sm:$0xff]
        %v476 = vld [vmem:[#allocation11 + $0x1c0] sm:$0xff]
        %v477 = vld [vmem:[#allocation11 + $0x1c8] sm:$0xff]
        %v478 = vld [vmem:[#allocation11 + $0x1d0] sm:$0xff]
        %v479 = vld [vmem:[#allocation11 + $0x1d8] sm:$0xff]
        %v480 = vld [vmem:[#allocation11 + $0x1e0] sm:$0xff]
        %v481 = vld [vmem:[#allocation11 + $0x1e8] sm:$0xff]
        %v482 = vld [vmem:[#allocation11 + $0x1f0] sm:$0xff]
        %v483 = vld [vmem:[#allocation11 + $0x1f8] sm:$0xff]
        %v484 = vld [vmem:[#allocation11 + $0x200] sm:$0xff]
        %v485 = vld [vmem:[#allocation11 + $0x208] sm:$0xff]
        %v486 = vld [vmem:[#allocation11 + $0x210] sm:$0xff]
        %v487 = vld [vmem:[#allocation11 + $0x218] sm:$0xff]
        %v488 = vld [vmem:[#allocation11 + $0x220] sm:$0xff]
        %v489 = vld [vmem:[#allocation11 + $0x228] sm:$0xff]
        %v490 = vld [vmem:[#allocation11 + $0x230] sm:$0xff]
        %v491 = vld [vmem:[#allocation11 + $0x238] sm:$0xff]
        %v492 = vld [vmem:[#allocation11 + $0x240] sm:$0xff]
        %v493 = vld [vmem:[#allocation11 + $0x248] sm:$0xff]
        %v494 = vld [vmem:[#allocation11 + $0x250] sm:$0xff]
        %v495 = vld [vmem:[#allocation11 + $0x258] sm:$0xff]
        %v496 = vld [vmem:[#allocation11 + $0x260] sm:$0xff]
        %v497 = vld [vmem:[#allocation11 + $0x268] sm:$0xff]
        %v498 = vld [vmem:[#allocation11 + $0x270] sm:$0xff]
        %v499 = vld [vmem:[#allocation11 + $0x278] sm:$0xff]
        %v500 = vld [vmem:[#allocation11 + $0x280] sm:$0xff]
        %v501 = vld [vmem:[#allocation11 + $0x288] sm:$0xff]
        %v502 = vld [vmem:[#allocation11 + $0x290] sm:$0xff]
        %v503 = vld [vmem:[#allocation11 + $0x298] sm:$0xff]
        %v504 = vld [vmem:[#allocation11 + $0x2a0] sm:$0xff]
        %v505 = vld [vmem:[#allocation11 + $0x2a8] sm:$0xff]
        %v506 = vld [vmem:[#allocation11 + $0x2b0] sm:$0xff]
        %v507 = vld [vmem:[#allocation11 + $0x2b8] sm:$0xff]
        %v508 = vld [vmem:[#allocation11 + $0x2c0] sm:$0xff]
        %v509 = vld [vmem:[#allocation11 + $0x2c8] sm:$0xff]
        %v510 = vld [vmem:[#allocation11 + $0x2d0] sm:$0xff]
        %v511 = vld [vmem:[#allocation11 + $0x2d8] sm:$0xff]
        %v512 = vld [vmem:[#allocation11 + $0x2e0] sm:$0xff]
        %v513 = vld [vmem:[#allocation11 + $0x2e8] sm:$0xff]
        %v514 = vld [vmem:[#allocation11 + $0x2f0] sm:$0xff]
        %v515 = vld [vmem:[#allocation11 + $0x2f8] sm:$0xff]
        %v516 = vld [vmem:[#allocation11 + $0x300] sm:$0xff]
        %v517 = vld [vmem:[#allocation11 + $0x308] sm:$0xff]
        %v518 = vld [vmem:[#allocation11 + $0x310] sm:$0xff]
        %v519 = vld [vmem:[#allocation11 + $0x318] sm:$0xff]
        %v520 = vld [vmem:[#allocation11 + $0x320] sm:$0xff]
        %v521 = vld [vmem:[#allocation11 + $0x328] sm:$0xff]
        %v522 = vld [vmem:[#allocation11 + $0x330] sm:$0xff]
        %v523 = vld [vmem:[#allocation11 + $0x338] sm:$0xff]
        %v524 = vld [vmem:[#allocation11 + $0x340] sm:$0xff]
        %v525 = vld [vmem:[#allocation11 + $0x348] sm:$0xff]
        %v526 = vld [vmem:[#allocation11 + $0x350] sm:$0xff]
        %v527 = vld [vmem:[#allocation11 + $0x358] sm:$0xff]
        %v528 = vld [vmem:[#allocation11 + $0x360] sm:$0xff]
        %v529 = vld [vmem:[#allocation11 + $0x368] sm:$0xff]
        %v530 = vld [vmem:[#allocation11 + $0x370] sm:$0xff]
        %v531 = vld [vmem:[#allocation11 + $0x378] sm:$0xff]
        %v532 = vld [vmem:[#allocation11 + $0x380] sm:$0xff]
        %v533 = vld [vmem:[#allocation11 + $0x388] sm:$0xff]
        %v534 = vld [vmem:[#allocation11 + $0x390] sm:$0xff]
        %v535 = vld [vmem:[#allocation11 + $0x398] sm:$0xff]
        %v536 = vld [vmem:[#allocation11 + $0x3a0] sm:$0xff]
        %v537 = vld [vmem:[#allocation11 + $0x3a8] sm:$0xff]
        %v538 = vld [vmem:[#allocation11 + $0x3b0] sm:$0xff]
        %v539 = vld [vmem:[#allocation11 + $0x3b8] sm:$0xff]
        %v540 = vld [vmem:[#allocation11 + $0x3c0] sm:$0xff]
        %v541 = vld [vmem:[#allocation11 + $0x3c8] sm:$0xff]
        %v542 = vld [vmem:[#allocation11 + $0x3d0] sm:$0xff]
        %v543 = vld [vmem:[#allocation11 + $0x3d8] sm:$0xff]
        %v544 = vld [vmem:[#allocation11 + $0x3e0] sm:$0xff]
        %v545 = vld [vmem:[#allocation11 + $0x3e8] sm:$0xff]
        %v546 = vld [vmem:[#allocation11 + $0x3f0] sm:$0xff]
        %v547 = vld [vmem:[#allocation11 + $0x3f8] sm:$0xff]
        %v676 = vunpack.c.l.b16 %v420
        %v677 = vunpack.c.h.b16 %v420
        %v678 = vunpack.c.l.b16 %v421
        %v679 = vunpack.c.h.b16 %v421
        %v680 = vunpack.c.l.b16 %v422
        %v681 = vunpack.c.h.b16 %v422
        %v682 = vunpack.c.l.b16 %v423
        %v683 = vunpack.c.h.b16 %v423
        %v684 = vunpack.c.l.b16 %v424
        %v685 = vunpack.c.h.b16 %v424
        %v686 = vunpack.c.l.b16 %v425
        %v687 = vunpack.c.h.b16 %v425
        %v688 = vunpack.c.l.b16 %v426
        %v689 = vunpack.c.h.b16 %v426
        %v690 = vunpack.c.l.b16 %v427
        %v691 = vunpack.c.h.b16 %v427
        %v692 = vunpack.c.l.b16 %v428
        %v693 = vunpack.c.h.b16 %v428
        %v694 = vunpack.c.l.b16 %v429
        %v695 = vunpack.c.h.b16 %v429
        %v696 = vunpack.c.l.b16 %v430
        %v697 = vunpack.c.h.b16 %v430
        %v698 = vunpack.c.l.b16 %v431
        %v699 = vunpack.c.h.b16 %v431
        %v700 = vunpack.c.l.b16 %v432
        %v701 = vunpack.c.h.b16 %v432
        %v702 = vunpack.c.l.b16 %v433
        %v703 = vunpack.c.h.b16 %v433
        %v704 = vunpack.c.l.b16 %v434
        %v705 = vunpack.c.h.b16 %v434
        %v706 = vunpack.c.l.b16 %v435
        %v707 = vunpack.c.h.b16 %v435
        %v708 = vunpack.c.l.b16 %v436
        %v709 = vunpack.c.h.b16 %v436
        %v710 = vunpack.c.l.b16 %v437
        %v711 = vunpack.c.h.b16 %v437
        %v712 = vunpack.c.l.b16 %v438
        %v713 = vunpack.c.h.b16 %v438
        %v714 = vunpack.c.l.b16 %v439
        %v715 = vunpack.c.h.b16 %v439
        %v716 = vunpack.c.l.b16 %v440
        %v717 = vunpack.c.h.b16 %v440
        %v718 = vunpack.c.l.b16 %v441
        %v719 = vunpack.c.h.b16 %v441
        %v720 = vunpack.c.l.b16 %v442
        %v721 = vunpack.c.h.b16 %v442
        %v722 = vunpack.c.l.b16 %v443
        %v723 = vunpack.c.h.b16 %v443
        %v724 = vunpack.c.l.b16 %v444
        %v725 = vunpack.c.h.b16 %v444
        %v726 = vunpack.c.l.b16 %v445
        %v727 = vunpack.c.h.b16 %v445
        %v728 = vunpack.c.l.b16 %v446
        %v729 = vunpack.c.h.b16 %v446
        %v730 = vunpack.c.l.b16 %v447
        %v731 = vunpack.c.h.b16 %v447
        %v732 = vunpack.c.l.b16 %v448
        %v733 = vunpack.c.h.b16 %v448
        %v734 = vunpack.c.l.b16 %v449
        %v735 = vunpack.c.h.b16 %v449
        %v736 = vunpack.c.l.b16 %v450
        %v737 = vunpack.c.h.b16 %v450
        %v738 = vunpack.c.l.b16 %v451
        %v739 = vunpack.c.h.b16 %v451
        %v740 = vunpack.c.l.b16 %v452
        %v741 = vunpack.c.h.b16 %v452
        %v742 = vunpack.c.l.b16 %v453
        %v743 = vunpack.c.h.b16 %v453
        %v744 = vunpack.c.l.b16 %v454
        %v745 = vunpack.c.h.b16 %v454
        %v746 = vunpack.c.l.b16 %v455
        %v747 = vunpack.c.h.b16 %v455
        %v748 = vunpack.c.l.b16 %v456
        %v749 = vunpack.c.h.b16 %v456
        %v750 = vunpack.c.l.b16 %v457
        %v751 = vunpack.c.h.b16 %v457
        %v752 = vunpack.c.l.b16 %v458
        %v753 = vunpack.c.h.b16 %v458
        %v754 = vunpack.c.l.b16 %v459
        %v755 = vunpack.c.h.b16 %v459
        %v756 = vunpack.c.l.b16 %v460
        %v757 = vunpack.c.h.b16 %v460
        %v758 = vunpack.c.l.b16 %v461
        %v759 = vunpack.c.h.b16 %v461
        %v760 = vunpack.c.l.b16 %v462
        %v761 = vunpack.c.h.b16 %v462
        %v762 = vunpack.c.l.b16 %v463
        %v763 = vunpack.c.h.b16 %v463
        %v764 = vunpack.c.l.b16 %v464
        %v765 = vunpack.c.h.b16 %v464
        %v766 = vunpack.c.l.b16 %v465
        %v767 = vunpack.c.h.b16 %v465
        %v768 = vunpack.c.l.b16 %v466
        %v769 = vunpack.c.h.b16 %v466
        %v770 = vunpack.c.l.b16 %v467
        %v771 = vunpack.c.h.b16 %v467
        %v772 = vunpack.c.l.b16 %v468
        %v773 = vunpack.c.h.b16 %v468
        %v774 = vunpack.c.l.b16 %v469
        %v775 = vunpack.c.h.b16 %v469
        %v776 = vunpack.c.l.b16 %v470
        %v777 = vunpack.c.h.b16 %v470
        %v778 = vunpack.c.l.b16 %v471
        %v779 = vunpack.c.h.b16 %v471
        %v780 = vunpack.c.l.b16 %v472
        %v781 = vunpack.c.h.b16 %v472
        %v782 = vunpack.c.l.b16 %v473
        %v783 = vunpack.c.h.b16 %v473
        %v784 = vunpack.c.l.b16 %v474
        %v785 = vunpack.c.h.b16 %v474
        %v786 = vunpack.c.l.b16 %v475
        %v787 = vunpack.c.h.b16 %v475
        %v788 = vunpack.c.l.b16 %v476
        %v789 = vunpack.c.h.b16 %v476
        %v790 = vunpack.c.l.b16 %v477
        %v791 = vunpack.c.h.b16 %v477
        %v792 = vunpack.c.l.b16 %v478
        %v793 = vunpack.c.h.b16 %v478
        %v794 = vunpack.c.l.b16 %v479
        %v795 = vunpack.c.h.b16 %v479
        %v796 = vunpack.c.l.b16 %v480
        %v797 = vunpack.c.h.b16 %v480
        %v798 = vunpack.c.l.b16 %v481
        %v799 = vunpack.c.h.b16 %v481
        %v800 = vunpack.c.l.b16 %v482
        %v801 = vunpack.c.h.b16 %v482
        %v802 = vunpack.c.l.b16 %v483
        %v803 = vunpack.c.h.b16 %v483
        %v804 = vunpack.c.l.b16 %v484
        %v805 = vunpack.c.h.b16 %v484
        %v806 = vunpack.c.l.b16 %v485
        %v807 = vunpack.c.h.b16 %v485
        %v808 = vunpack.c.l.b16 %v486
        %v809 = vunpack.c.h.b16 %v486
        %v810 = vunpack.c.l.b16 %v487
        %v811 = vunpack.c.h.b16 %v487
        %v812 = vunpack.c.l.b16 %v488
        %v813 = vunpack.c.h.b16 %v488
        %v814 = vunpack.c.l.b16 %v489
        %v815 = vunpack.c.h.b16 %v489
        %v816 = vunpack.c.l.b16 %v490
        %v817 = vunpack.c.h.b16 %v490
        %v818 = vunpack.c.l.b16 %v491
        %v819 = vunpack.c.h.b16 %v491
        %v820 = vunpack.c.l.b16 %v492
        %v821 = vunpack.c.h.b16 %v492
        %v822 = vunpack.c.l.b16 %v493
        %v823 = vunpack.c.h.b16 %v493
        %v824 = vunpack.c.l.b16 %v494
        %v825 = vunpack.c.h.b16 %v494
        %v826 = vunpack.c.l.b16 %v495
        %v827 = vunpack.c.h.b16 %v495
        %v828 = vunpack.c.l.b16 %v496
        %v829 = vunpack.c.h.b16 %v496
        %v830 = vunpack.c.l.b16 %v497
        %v831 = vunpack.c.h.b16 %v497
        %v832 = vunpack.c.l.b16 %v498
        %v833 = vunpack.c.h.b16 %v498
        %v834 = vunpack.c.l.b16 %v499
        %v835 = vunpack.c.h.b16 %v499
        %v836 = vunpack.c.l.b16 %v500
        %v837 = vunpack.c.h.b16 %v500
        %v838 = vunpack.c.l.b16 %v501
        %v839 = vunpack.c.h.b16 %v501
        %v840 = vunpack.c.l.b16 %v502
        %v841 = vunpack.c.h.b16 %v502
        %v842 = vunpack.c.l.b16 %v503
        %v843 = vunpack.c.h.b16 %v503
        %v844 = vunpack.c.l.b16 %v504
        %v845 = vunpack.c.h.b16 %v504
        %v846 = vunpack.c.l.b16 %v505
        %v847 = vunpack.c.h.b16 %v505
        %v848 = vunpack.c.l.b16 %v506
        %v849 = vunpack.c.h.b16 %v506
        %v850 = vunpack.c.l.b16 %v507
        %v851 = vunpack.c.h.b16 %v507
        %v852 = vunpack.c.l.b16 %v508
        %v853 = vunpack.c.h.b16 %v508
        %v854 = vunpack.c.l.b16 %v509
        %v855 = vunpack.c.h.b16 %v509
        %v856 = vunpack.c.l.b16 %v510
        %v857 = vunpack.c.h.b16 %v510
        %v858 = vunpack.c.l.b16 %v511
        %v859 = vunpack.c.h.b16 %v511
        %v860 = vunpack.c.l.b16 %v512
        %v861 = vunpack.c.h.b16 %v512
        %v862 = vunpack.c.l.b16 %v513
        %v863 = vunpack.c.h.b16 %v513
        %v864 = vunpack.c.l.b16 %v514
        %v865 = vunpack.c.h.b16 %v514
        %v866 = vunpack.c.l.b16 %v515
        %v867 = vunpack.c.h.b16 %v515
        %v868 = vunpack.c.l.b16 %v516
        %v869 = vunpack.c.h.b16 %v516
        %v870 = vunpack.c.l.b16 %v517
        %v871 = vunpack.c.h.b16 %v517
        %v872 = vunpack.c.l.b16 %v518
        %v873 = vunpack.c.h.b16 %v518
        %v874 = vunpack.c.l.b16 %v519
        %v875 = vunpack.c.h.b16 %v519
        %v876 = vunpack.c.l.b16 %v520
        %v877 = vunpack.c.h.b16 %v520
        %v878 = vunpack.c.l.b16 %v521
        %v879 = vunpack.c.h.b16 %v521
        %v880 = vunpack.c.l.b16 %v522
        %v881 = vunpack.c.h.b16 %v522
        %v882 = vunpack.c.l.b16 %v523
        %v883 = vunpack.c.h.b16 %v523
        %v884 = vunpack.c.l.b16 %v524
        %v885 = vunpack.c.h.b16 %v524
        %v886 = vunpack.c.l.b16 %v525
        %v887 = vunpack.c.h.b16 %v525
        %v888 = vunpack.c.l.b16 %v526
        %v889 = vunpack.c.h.b16 %v526
        %v890 = vunpack.c.l.b16 %v527
        %v891 = vunpack.c.h.b16 %v527
        %v892 = vunpack.c.l.b16 %v528
        %v893 = vunpack.c.h.b16 %v528
        %v894 = vunpack.c.l.b16 %v529
        %v895 = vunpack.c.h.b16 %v529
        %v896 = vunpack.c.l.b16 %v530
        %v897 = vunpack.c.h.b16 %v530
        %v898 = vunpack.c.l.b16 %v531
        %v899 = vunpack.c.h.b16 %v531
        %v900 = vunpack.c.l.b16 %v532
        %v901 = vunpack.c.h.b16 %v532
        %v902 = vunpack.c.l.b16 %v533
        %v903 = vunpack.c.h.b16 %v533
        %v904 = vunpack.c.l.b16 %v534
        %v905 = vunpack.c.h.b16 %v534
        %v906 = vunpack.c.l.b16 %v535
        %v907 = vunpack.c.h.b16 %v535
        %v908 = vunpack.c.l.b16 %v536
        %v909 = vunpack.c.h.b16 %v536
        %v910 = vunpack.c.l.b16 %v537
        %v911 = vunpack.c.h.b16 %v537
        %v912 = vunpack.c.l.b16 %v538
        %v913 = vunpack.c.h.b16 %v538
        %v914 = vunpack.c.l.b16 %v539
        %v915 = vunpack.c.h.b16 %v539
        %v916 = vunpack.c.l.b16 %v540
        %v917 = vunpack.c.h.b16 %v540
        %v918 = vunpack.c.l.b16 %v541
        %v919 = vunpack.c.h.b16 %v541
        %v920 = vunpack.c.l.b16 %v542
        %v921 = vunpack.c.h.b16 %v542
        %v922 = vunpack.c.l.b16 %v543
        %v923 = vunpack.c.h.b16 %v543
        %v924 = vunpack.c.l.b16 %v544
        %v925 = vunpack.c.h.b16 %v544
        %v926 = vunpack.c.l.b16 %v545
        %v927 = vunpack.c.h.b16 %v545
        %v928 = vunpack.c.l.b16 %v546
        %v929 = vunpack.c.h.b16 %v546
        %v930 = vunpack.c.l.b16 %v547
        %v931 = vunpack.c.h.b16 %v547
        %v932 = vpack.c.b16 %v680, %v676
        %v933 = vpack.c.b16 %v681, %v677
        %v934 = vpack.c.b16 %v682, %v678
        %v935 = vpack.c.b16 %v683, %v679
        %v936 = vpack.c.b16 %v688, %v684
        %v937 = vpack.c.b16 %v689, %v685
        %v938 = vpack.c.b16 %v690, %v686
        %v939 = vpack.c.b16 %v691, %v687
        %v940 = vpack.c.b16 %v696, %v692
        %v941 = vpack.c.b16 %v697, %v693
        %v942 = vpack.c.b16 %v698, %v694
        %v943 = vpack.c.b16 %v699, %v695
        %v944 = vpack.c.b16 %v704, %v700
        %v945 = vpack.c.b16 %v705, %v701
        %v946 = vpack.c.b16 %v706, %v702
        %v947 = vpack.c.b16 %v707, %v703
        %v948 = vpack.c.b16 %v712, %v708
        %v949 = vpack.c.b16 %v713, %v709
        %v950 = vpack.c.b16 %v714, %v710
        %v951 = vpack.c.b16 %v715, %v711
        %v952 = vpack.c.b16 %v720, %v716
        %v953 = vpack.c.b16 %v721, %v717
        %v954 = vpack.c.b16 %v722, %v718
        %v955 = vpack.c.b16 %v723, %v719
        %v956 = vpack.c.b16 %v728, %v724
        %v957 = vpack.c.b16 %v729, %v725
        %v958 = vpack.c.b16 %v730, %v726
        %v959 = vpack.c.b16 %v731, %v727
        %v960 = vpack.c.b16 %v736, %v732
        %v961 = vpack.c.b16 %v737, %v733
        %v962 = vpack.c.b16 %v738, %v734
        %v963 = vpack.c.b16 %v739, %v735
        %v964 = vpack.c.b16 %v744, %v740
        %v965 = vpack.c.b16 %v745, %v741
        %v966 = vpack.c.b16 %v746, %v742
        %v967 = vpack.c.b16 %v747, %v743
        %v968 = vpack.c.b16 %v752, %v748
        %v969 = vpack.c.b16 %v753, %v749
        %v970 = vpack.c.b16 %v754, %v750
        %v971 = vpack.c.b16 %v755, %v751
        %v972 = vpack.c.b16 %v760, %v756
        %v973 = vpack.c.b16 %v761, %v757
        %v974 = vpack.c.b16 %v762, %v758
        %v975 = vpack.c.b16 %v763, %v759
        %v976 = vpack.c.b16 %v768, %v764
        %v977 = vpack.c.b16 %v769, %v765
        %v978 = vpack.c.b16 %v770, %v766
        %v979 = vpack.c.b16 %v771, %v767
        %v980 = vpack.c.b16 %v776, %v772
        %v981 = vpack.c.b16 %v777, %v773
        %v982 = vpack.c.b16 %v778, %v774
        %v983 = vpack.c.b16 %v779, %v775
        %v984 = vpack.c.b16 %v784, %v780
        %v985 = vpack.c.b16 %v785, %v781
        %v986 = vpack.c.b16 %v786, %v782
        %v987 = vpack.c.b16 %v787, %v783
        %v988 = vpack.c.b16 %v792, %v788
        %v989 = vpack.c.b16 %v793, %v789
        %v990 = vpack.c.b16 %v794, %v790
        %v991 = vpack.c.b16 %v795, %v791
        %v992 = vpack.c.b16 %v800, %v796
        %v993 = vpack.c.b16 %v801, %v797
        %v994 = vpack.c.b16 %v802, %v798
        %v995 = vpack.c.b16 %v803, %v799
        %v996 = vpack.c.b16 %v808, %v804
        %v997 = vpack.c.b16 %v809, %v805
        %v998 = vpack.c.b16 %v810, %v806
        %v999 = vpack.c.b16 %v811, %v807
        %v1000 = vpack.c.b16 %v816, %v812
        %v1001 = vpack.c.b16 %v817, %v813
        %v1002 = vpack.c.b16 %v818, %v814
        %v1003 = vpack.c.b16 %v819, %v815
        %v1004 = vpack.c.b16 %v824, %v820
        %v1005 = vpack.c.b16 %v825, %v821
        %v1006 = vpack.c.b16 %v826, %v822
        %v1007 = vpack.c.b16 %v827, %v823
        %v1008 = vpack.c.b16 %v832, %v828
        %v1009 = vpack.c.b16 %v833, %v829
        %v1010 = vpack.c.b16 %v834, %v830
        %v1011 = vpack.c.b16 %v835, %v831
        %v1012 = vpack.c.b16 %v840, %v836
        %v1013 = vpack.c.b16 %v841, %v837
        %v1014 = vpack.c.b16 %v842, %v838
        %v1015 = vpack.c.b16 %v843, %v839
        %v1016 = vpack.c.b16 %v848, %v844
        %v1017 = vpack.c.b16 %v849, %v845
        %v1018 = vpack.c.b16 %v850, %v846
        %v1019 = vpack.c.b16 %v851, %v847
        %v1020 = vpack.c.b16 %v856, %v852
        %v1021 = vpack.c.b16 %v857, %v853
        %v1022 = vpack.c.b16 %v858, %v854
        %v1023 = vpack.c.b16 %v859, %v855
        %v1024 = vpack.c.b16 %v864, %v860
        %v1025 = vpack.c.b16 %v865, %v861
        %v1026 = vpack.c.b16 %v866, %v862
        %v1027 = vpack.c.b16 %v867, %v863
        %v1028 = vpack.c.b16 %v872, %v868
        %v1029 = vpack.c.b16 %v873, %v869
        %v1030 = vpack.c.b16 %v874, %v870
        %v1031 = vpack.c.b16 %v875, %v871
        %v1032 = vpack.c.b16 %v880, %v876
        %v1033 = vpack.c.b16 %v881, %v877
        %v1034 = vpack.c.b16 %v882, %v878
        %v1035 = vpack.c.b16 %v883, %v879
        %v1036 = vpack.c.b16 %v888, %v884
        %v1037 = vpack.c.b16 %v889, %v885
        %v1038 = vpack.c.b16 %v890, %v886
        %v1039 = vpack.c.b16 %v891, %v887
        %v1040 = vpack.c.b16 %v896, %v892
        %v1041 = vpack.c.b16 %v897, %v893
        %v1042 = vpack.c.b16 %v898, %v894
        %v1043 = vpack.c.b16 %v899, %v895
        %v1044 = vpack.c.b16 %v904, %v900
        %v1045 = vpack.c.b16 %v905, %v901
        %v1046 = vpack.c.b16 %v906, %v902
        %v1047 = vpack.c.b16 %v907, %v903
        %v1048 = vpack.c.b16 %v912, %v908
        %v1049 = vpack.c.b16 %v913, %v909
        %v1050 = vpack.c.b16 %v914, %v910
        %v1051 = vpack.c.b16 %v915, %v911
        %v1052 = vpack.c.b16 %v920, %v916
        %v1053 = vpack.c.b16 %v921, %v917
        %v1054 = vpack.c.b16 %v922, %v918
        %v1055 = vpack.c.b16 %v923, %v919
        %v1056 = vpack.c.b16 %v928, %v924
        %v1057 = vpack.c.b16 %v929, %v925
        %v1058 = vpack.c.b16 %v930, %v926
        %v1059 = vpack.c.b16 %v931, %v927
        %1188 = vmatpush.bf16.msra.mxu0 %v960
        %1189 = vmatpush.bf16.msra.mxu0 %v956
        %1190 = vmatpush.bf16.msra.mxu0 %v952
        %1191 = vmatpush.bf16.msra.mxu0 %v948
        %1192 = vmatpush.bf16.msra.mxu0 %v944
        %1193 = vmatpush.bf16.msra.mxu0 %v940
        %1194 = vmatpush.bf16.msra.mxu0 %v936
        %1195 = vmatpush.bf16.msra.mxu0 %v932
        %1196 = vmatmul.bf16.gmra.mxu0 %v416
        %v1197 = vpop.f32.mrf.mxu0
        %v1198 = vadd.f32 0.0, %v1197
        %v1199 = vpop.f32.mrf.mxu0
        %1200 = vdwg.mxu0
        %1201 = vmatpush.bf16.msra.mxu0 %v992
        %1202 = vmatpush.bf16.msra.mxu0 %v988
        %1203 = vmatpush.bf16.msra.mxu0 %v984
        %1204 = vmatpush.bf16.msra.mxu0 %v980
        %1205 = vmatpush.bf16.msra.mxu0 %v976
        %1206 = vmatpush.bf16.msra.mxu0 %v972
        %1207 = vmatpush.bf16.msra.mxu0 %v968
        %1208 = vmatpush.bf16.msra.mxu0 %v964
        %1209 = vmatmul.bf16.gmra.mxu0 %v417
        %v1210 = vpop.f32.mrf.mxu0
        %v1211 = vadd.f32 %v1198, %v1210
        %v1212 = vpop.f32.mrf.mxu0
        %1213 = vdwg.mxu0
        %1214 = vmatpush.bf16.msra.mxu0 %v1024
        %1215 = vmatpush.bf16.msra.mxu0 %v1020
        %1216 = vmatpush.bf16.msra.mxu0 %v1016
        %1217 = vmatpush.bf16.msra.mxu0 %v1012
        %1218 = vmatpush.bf16.msra.mxu0 %v1008
        %1219 = vmatpush.bf16.msra.mxu0 %v1004
        %1220 = vmatpush.bf16.msra.mxu0 %v1000
        %1221 = vmatpush.bf16.msra.mxu0 %v996
        %1222 = vmatmul.bf16.gmra.mxu0 %v418
        %v1223 = vpop.f32.mrf.mxu0
        %v1224 = vadd.f32 %v1211, %v1223
        %v1225 = vpop.f32.mrf.mxu0
        %1226 = vdwg.mxu0
        %1227 = vmatpush.bf16.msra.mxu0 %v1056
        %1228 = vmatpush.bf16.msra.mxu0 %v1052
        %1229 = vmatpush.bf16.msra.mxu0 %v1048
        %1230 = vmatpush.bf16.msra.mxu0 %v1044
        %1231 = vmatpush.bf16.msra.mxu0 %v1040
        %1232 = vmatpush.bf16.msra.mxu0 %v1036
        %1233 = vmatpush.bf16.msra.mxu0 %v1032
        %1234 = vmatpush.bf16.msra.mxu0 %v1028
        %1235 = vmatmul.bf16.gmra.mxu0 %v419
        %v1236 = vpop.f32.mrf.mxu0
        %v1237 = vadd.f32 %v1224, %v1236
        %v1238 = vpop.f32.mrf.mxu0
        %1239 = vdwg.mxu0
        %1240 = vmatpush.bf16.msra.mxu0 %v961
        %1241 = vmatpush.bf16.msra.mxu0 %v957
        %1242 = vmatpush.bf16.msra.mxu0 %v953
        %1243 = vmatpush.bf16.msra.mxu0 %v949
        %1244 = vmatpush.bf16.msra.mxu0 %v945
        %1245 = vmatpush.bf16.msra.mxu0 %v941
        %1246 = vmatpush.bf16.msra.mxu0 %v937
        %1247 = vmatpush.bf16.msra.mxu0 %v933
        %1248 = vmatmul.bf16.gmra.mxu0 %v416
        %v1249 = vpop.f32.mrf.mxu0
        %v1250 = vadd.f32 0.0, %v1249
        %v1251 = vpop.f32.mrf.mxu0
        %1252 = vdwg.mxu0
        %1253 = vmatpush.bf16.msra.mxu0 %v993
        %1254 = vmatpush.bf16.msra.mxu0 %v989
        %1255 = vmatpush.bf16.msra.mxu0 %v985
        %1256 = vmatpush.bf16.msra.mxu0 %v981
        %1257 = vmatpush.bf16.msra.mxu0 %v977
        %1258 = vmatpush.bf16.msra.mxu0 %v973
        %1259 = vmatpush.bf16.msra.mxu0 %v969
        %1260 = vmatpush.bf16.msra.mxu0 %v965
        %1261 = vmatmul.bf16.gmra.mxu0 %v417
        %v1262 = vpop.f32.mrf.mxu0
        %v1263 = vadd.f32 %v1250, %v1262
        %v1264 = vpop.f32.mrf.mxu0
        %1265 = vdwg.mxu0
        %1266 = vmatpush.bf16.msra.mxu0 %v1025
        %1267 = vmatpush.bf16.msra.mxu0 %v1021
        %1268 = vmatpush.bf16.msra.mxu0 %v1017
        %1269 = vmatpush.bf16.msra.mxu0 %v1013
        %1270 = vmatpush.bf16.msra.mxu0 %v1009
        %1271 = vmatpush.bf16.msra.mxu0 %v1005
        %1272 = vmatpush.bf16.msra.mxu0 %v1001
        %1273 = vmatpush.bf16.msra.mxu0 %v997
        %1274 = vmatmul.bf16.gmra.mxu0 %v418
        %v1275 = vpop.f32.mrf.mxu0
        %v1276 = vadd.f32 %v1263, %v1275
        %v1277 = vpop.f32.mrf.mxu0
        %1278 = vdwg.mxu0
        %1279 = vmatpush.bf16.msra.mxu0 %v1057
        %1280 = vmatpush.bf16.msra.mxu0 %v1053
        %1281 = vmatpush.bf16.msra.mxu0 %v1049
        %1282 = vmatpush.bf16.msra.mxu0 %v1045
        %1283 = vmatpush.bf16.msra.mxu0 %v1041
        %1284 = vmatpush.bf16.msra.mxu0 %v1037
        %1285 = vmatpush.bf16.msra.mxu0 %v1033
        %1286 = vmatpush.bf16.msra.mxu0 %v1029
        %1287 = vmatmul.bf16.gmra.mxu0 %v419
        %v1288 = vpop.f32.mrf.mxu0
        %v1289 = vadd.f32 %v1276, %v1288
        %v1290 = vpop.f32.mrf.mxu0
        %1291 = vdwg.mxu0
        %1292 = vmatpush.bf16.msra.mxu0 %v962
        %1293 = vmatpush.bf16.msra.mxu0 %v958
        %1294 = vmatpush.bf16.msra.mxu0 %v954
        %1295 = vmatpush.bf16.msra.mxu0 %v950
        %1296 = vmatpush.bf16.msra.mxu0 %v946
        %1297 = vmatpush.bf16.msra.mxu0 %v942
        %1298 = vmatpush.bf16.msra.mxu0 %v938
        %1299 = vmatpush.bf16.msra.mxu0 %v934
        %1300 = vmatmul.bf16.gmra.mxu0 %v416
        %v1301 = vpop.f32.mrf.mxu0
        %v1302 = vadd.f32 0.0, %v1301
        %v1303 = vpop.f32.mrf.mxu0
        %1304 = vdwg.mxu0
        %1305 = vmatpush.bf16.msra.mxu0 %v994
        %1306 = vmatpush.bf16.msra.mxu0 %v990
        %1307 = vmatpush.bf16.msra.mxu0 %v986
        %1308 = vmatpush.bf16.msra.mxu0 %v982
        %1309 = vmatpush.bf16.msra.mxu0 %v978
        %1310 = vmatpush.bf16.msra.mxu0 %v974
        %1311 = vmatpush.bf16.msra.mxu0 %v970
        %1312 = vmatpush.bf16.msra.mxu0 %v966
        %1313 = vmatmul.bf16.gmra.mxu0 %v417
        %v1314 = vpop.f32.mrf.mxu0
        %v1315 = vadd.f32 %v1302, %v1314
        %v1316 = vpop.f32.mrf.mxu0
        %1317 = vdwg.mxu0
        %1318 = vmatpush.bf16.msra.mxu0 %v1026
        %1319 = vmatpush.bf16.msra.mxu0 %v1022
        %1320 = vmatpush.bf16.msra.mxu0 %v1018
        %1321 = vmatpush.bf16.msra.mxu0 %v1014
        %1322 = vmatpush.bf16.msra.mxu0 %v1010
        %1323 = vmatpush.bf16.msra.mxu0 %v1006
        %1324 = vmatpush.bf16.msra.mxu0 %v1002
        %1325 = vmatpush.bf16.msra.mxu0 %v998
        %1326 = vmatmul.bf16.gmra.mxu0 %v418
        %v1327 = vpop.f32.mrf.mxu0
        %v1328 = vadd.f32 %v1315, %v1327
        %v1329 = vpop.f32.mrf.mxu0
        %1330 = vdwg.mxu0
        %1331 = vmatpush.bf16.msra.mxu0 %v1058
        %1332 = vmatpush.bf16.msra.mxu0 %v1054
        %1333 = vmatpush.bf16.msra.mxu0 %v1050
        %1334 = vmatpush.bf16.msra.mxu0 %v1046
        %1335 = vmatpush.bf16.msra.mxu0 %v1042
        %1336 = vmatpush.bf16.msra.mxu0 %v1038
        %1337 = vmatpush.bf16.msra.mxu0 %v1034
        %1338 = vmatpush.bf16.msra.mxu0 %v1030
        %1339 = vmatmul.bf16.gmra.mxu0 %v419
        %v1340 = vpop.f32.mrf.mxu0
        %v1341 = vadd.f32 %v1328, %v1340
        %v1342 = vpop.f32.mrf.mxu0
        %1343 = vdwg.mxu0
        %1344 = vmatpush.bf16.msra.mxu0 %v963
        %1345 = vmatpush.bf16.msra.mxu0 %v959
        %1346 = vmatpush.bf16.msra.mxu0 %v955
        %1347 = vmatpush.bf16.msra.mxu0 %v951
        %1348 = vmatpush.bf16.msra.mxu0 %v947
        %1349 = vmatpush.bf16.msra.mxu0 %v943
        %1350 = vmatpush.bf16.msra.mxu0 %v939
        %1351 = vmatpush.bf16.msra.mxu0 %v935
        %1352 = vmatmul.bf16.gmra.mxu0 %v416
        %v1353 = vpop.f32.mrf.mxu0
        %v1354 = vadd.f32 0.0, %v1353
        %v1355 = vpop.f32.mrf.mxu0
        %1356 = vdwg.mxu0
        %1357 = vmatpush.bf16.msra.mxu0 %v995
        %1358 = vmatpush.bf16.msra.mxu0 %v991
        %1359 = vmatpush.bf16.msra.mxu0 %v987
        %1360 = vmatpush.bf16.msra.mxu0 %v983
        %1361 = vmatpush.bf16.msra.mxu0 %v979
        %1362 = vmatpush.bf16.msra.mxu0 %v975
        %1363 = vmatpush.bf16.msra.mxu0 %v971
        %1364 = vmatpush.bf16.msra.mxu0 %v967
        %1365 = vmatmul.bf16.gmra.mxu0 %v417
        %v1366 = vpop.f32.mrf.mxu0
        %v1367 = vadd.f32 %v1354, %v1366
        %v1368 = vpop.f32.mrf.mxu0
        %1369 = vdwg.mxu0
        %1370 = vmatpush.bf16.msra.mxu0 %v1027
        %1371 = vmatpush.bf16.msra.mxu0 %v1023
        %1372 = vmatpush.bf16.msra.mxu0 %v1019
        %1373 = vmatpush.bf16.msra.mxu0 %v1015
        %1374 = vmatpush.bf16.msra.mxu0 %v1011
        %1375 = vmatpush.bf16.msra.mxu0 %v1007
        %1376 = vmatpush.bf16.msra.mxu0 %v1003
        %1377 = vmatpush.bf16.msra.mxu0 %v999
        %1378 = vmatmul.bf16.gmra.mxu0 %v418
        %v1379 = vpop.f32.mrf.mxu0
        %v1380 = vadd.f32 %v1367, %v1379
        %v1381 = vpop.f32.mrf.mxu0
        %1382 = vdwg.mxu0
        %1383 = vmatpush.bf16.msra.mxu0 %v1059
        %1384 = vmatpush.bf16.msra.mxu0 %v1055
        %1385 = vmatpush.bf16.msra.mxu0 %v1051
        %1386 = vmatpush.bf16.msra.mxu0 %v1047
        %1387 = vmatpush.bf16.msra.mxu0 %v1043
        %1388 = vmatpush.bf16.msra.mxu0 %v1039
        %1389 = vmatpush.bf16.msra.mxu0 %v1035
        %1390 = vmatpush.bf16.msra.mxu0 %v1031
        %1391 = vmatmul.bf16.gmra.mxu0 %v419
        %v1392 = vpop.f32.mrf.mxu0
        %v1393 = vadd.f32 %v1380, %v1392
        %v1394 = vpop.f32.mrf.mxu0
        %1395 = vdwg.mxu0
        %v1524 = vunpack.c.l.b16 %v279
        %v1525 = vunpack.c.h.b16 %v279
        %v1526 = vunpack.c.l.b16 %v280
        %v1527 = vunpack.c.h.b16 %v280
        %v1528 = vunpack.c.l.b16 %v281
        %v1529 = vunpack.c.h.b16 %v281
        %v1530 = vunpack.c.l.b16 %v282
        %v1531 = vunpack.c.h.b16 %v282
        %v1532 = vunpack.c.l.b16 %v283
        %v1533 = vunpack.c.h.b16 %v283
        %v1534 = vunpack.c.l.b16 %v284
        %v1535 = vunpack.c.h.b16 %v284
        %v1536 = vunpack.c.l.b16 %v285
        %v1537 = vunpack.c.h.b16 %v285
        %v1538 = vunpack.c.l.b16 %v286
        %v1539 = vunpack.c.h.b16 %v286
        %v1540 = vunpack.c.l.b16 %v287
        %v1541 = vunpack.c.h.b16 %v287
        %v1542 = vunpack.c.l.b16 %v288
        %v1543 = vunpack.c.h.b16 %v288
        %v1544 = vunpack.c.l.b16 %v289
        %v1545 = vunpack.c.h.b16 %v289
        %v1546 = vunpack.c.l.b16 %v290
        %v1547 = vunpack.c.h.b16 %v290
        %v1548 = vunpack.c.l.b16 %v291
        %v1549 = vunpack.c.h.b16 %v291
        %v1550 = vunpack.c.l.b16 %v292
        %v1551 = vunpack.c.h.b16 %v292
        %v1552 = vunpack.c.l.b16 %v293
        %v1553 = vunpack.c.h.b16 %v293
        %v1554 = vunpack.c.l.b16 %v294
        %v1555 = vunpack.c.h.b16 %v294
        %v1556 = vunpack.c.l.b16 %v295
        %v1557 = vunpack.c.h.b16 %v295
        %v1558 = vunpack.c.l.b16 %v296
        %v1559 = vunpack.c.h.b16 %v296
        %v1560 = vunpack.c.l.b16 %v297
        %v1561 = vunpack.c.h.b16 %v297
        %v1562 = vunpack.c.l.b16 %v298
        %v1563 = vunpack.c.h.b16 %v298
        %v1564 = vunpack.c.l.b16 %v299
        %v1565 = vunpack.c.h.b16 %v299
        %v1566 = vunpack.c.l.b16 %v300
        %v1567 = vunpack.c.h.b16 %v300
        %v1568 = vunpack.c.l.b16 %v301
        %v1569 = vunpack.c.h.b16 %v301
        %v1570 = vunpack.c.l.b16 %v302
        %v1571 = vunpack.c.h.b16 %v302
        %v1572 = vunpack.c.l.b16 %v303
        %v1573 = vunpack.c.h.b16 %v303
        %v1574 = vunpack.c.l.b16 %v304
        %v1575 = vunpack.c.h.b16 %v304
        %v1576 = vunpack.c.l.b16 %v305
        %v1577 = vunpack.c.h.b16 %v305
        %v1578 = vunpack.c.l.b16 %v306
        %v1579 = vunpack.c.h.b16 %v306
        %v1580 = vunpack.c.l.b16 %v307
        %v1581 = vunpack.c.h.b16 %v307
        %v1582 = vunpack.c.l.b16 %v308
        %v1583 = vunpack.c.h.b16 %v308
        %v1584 = vunpack.c.l.b16 %v309
        %v1585 = vunpack.c.h.b16 %v309
        %v1586 = vunpack.c.l.b16 %v310
        %v1587 = vunpack.c.h.b16 %v310
        %v1588 = vunpack.c.l.b16 %v311
        %v1589 = vunpack.c.h.b16 %v311
        %v1590 = vunpack.c.l.b16 %v312
        %v1591 = vunpack.c.h.b16 %v312
        %v1592 = vunpack.c.l.b16 %v313
        %v1593 = vunpack.c.h.b16 %v313
        %v1594 = vunpack.c.l.b16 %v314
        %v1595 = vunpack.c.h.b16 %v314
        %v1596 = vunpack.c.l.b16 %v315
        %v1597 = vunpack.c.h.b16 %v315
        %v1598 = vunpack.c.l.b16 %v316
        %v1599 = vunpack.c.h.b16 %v316
        %v1600 = vunpack.c.l.b16 %v317
        %v1601 = vunpack.c.h.b16 %v317
        %v1602 = vunpack.c.l.b16 %v318
        %v1603 = vunpack.c.h.b16 %v318
        %v1604 = vunpack.c.l.b16 %v319
        %v1605 = vunpack.c.h.b16 %v319
        %v1606 = vunpack.c.l.b16 %v320
        %v1607 = vunpack.c.h.b16 %v320
        %v1608 = vunpack.c.l.b16 %v321
        %v1609 = vunpack.c.h.b16 %v321
        %v1610 = vunpack.c.l.b16 %v322
        %v1611 = vunpack.c.h.b16 %v322
        %v1612 = vunpack.c.l.b16 %v323
        %v1613 = vunpack.c.h.b16 %v323
        %v1614 = vunpack.c.l.b16 %v324
        %v1615 = vunpack.c.h.b16 %v324
        %v1616 = vunpack.c.l.b16 %v325
        %v1617 = vunpack.c.h.b16 %v325
        %v1618 = vunpack.c.l.b16 %v326
        %v1619 = vunpack.c.h.b16 %v326
        %v1620 = vunpack.c.l.b16 %v327
        %v1621 = vunpack.c.h.b16 %v327
        %v1622 = vunpack.c.l.b16 %v328
        %v1623 = vunpack.c.h.b16 %v328
        %v1624 = vunpack.c.l.b16 %v329
        %v1625 = vunpack.c.h.b16 %v329
        %v1626 = vunpack.c.l.b16 %v330
        %v1627 = vunpack.c.h.b16 %v330
        %v1628 = vunpack.c.l.b16 %v331
        %v1629 = vunpack.c.h.b16 %v331
        %v1630 = vunpack.c.l.b16 %v332
        %v1631 = vunpack.c.h.b16 %v332
        %v1632 = vunpack.c.l.b16 %v333
        %v1633 = vunpack.c.h.b16 %v333
        %v1634 = vunpack.c.l.b16 %v334
        %v1635 = vunpack.c.h.b16 %v334
        %v1636 = vunpack.c.l.b16 %v335
        %v1637 = vunpack.c.h.b16 %v335
        %v1638 = vunpack.c.l.b16 %v336
        %v1639 = vunpack.c.h.b16 %v336
        %v1640 = vunpack.c.l.b16 %v337
        %v1641 = vunpack.c.h.b16 %v337
        %v1642 = vunpack.c.l.b16 %v338
        %v1643 = vunpack.c.h.b16 %v338
        %v1644 = vunpack.c.l.b16 %v339
        %v1645 = vunpack.c.h.b16 %v339
        %v1646 = vunpack.c.l.b16 %v340
        %v1647 = vunpack.c.h.b16 %v340
        %v1648 = vunpack.c.l.b16 %v341
        %v1649 = vunpack.c.h.b16 %v341
        %v1650 = vunpack.c.l.b16 %v342
        %v1651 = vunpack.c.h.b16 %v342
        %v1652 = vunpack.c.l.b16 %v343
        %v1653 = vunpack.c.h.b16 %v343
        %v1654 = vunpack.c.l.b16 %v344
        %v1655 = vunpack.c.h.b16 %v344
        %v1656 = vunpack.c.l.b16 %v345
        %v1657 = vunpack.c.h.b16 %v345
        %v1658 = vunpack.c.l.b16 %v346
        %v1659 = vunpack.c.h.b16 %v346
        %v1660 = vunpack.c.l.b16 %v347
        %v1661 = vunpack.c.h.b16 %v347
        %v1662 = vunpack.c.l.b16 %v348
        %v1663 = vunpack.c.h.b16 %v348
        %v1664 = vunpack.c.l.b16 %v349
        %v1665 = vunpack.c.h.b16 %v349
        %v1666 = vunpack.c.l.b16 %v350
        %v1667 = vunpack.c.h.b16 %v350
        %v1668 = vunpack.c.l.b16 %v351
        %v1669 = vunpack.c.h.b16 %v351
        %v1670 = vunpack.c.l.b16 %v352
        %v1671 = vunpack.c.h.b16 %v352
        %v1672 = vunpack.c.l.b16 %v353
        %v1673 = vunpack.c.h.b16 %v353
        %v1674 = vunpack.c.l.b16 %v354
        %v1675 = vunpack.c.h.b16 %v354
        %v1676 = vunpack.c.l.b16 %v355
        %v1677 = vunpack.c.h.b16 %v355
        %v1678 = vunpack.c.l.b16 %v356
        %v1679 = vunpack.c.h.b16 %v356
        %v1680 = vunpack.c.l.b16 %v357
        %v1681 = vunpack.c.h.b16 %v357
        %v1682 = vunpack.c.l.b16 %v358
        %v1683 = vunpack.c.h.b16 %v358
        %v1684 = vunpack.c.l.b16 %v359
        %v1685 = vunpack.c.h.b16 %v359
        %v1686 = vunpack.c.l.b16 %v360
        %v1687 = vunpack.c.h.b16 %v360
        %v1688 = vunpack.c.l.b16 %v361
        %v1689 = vunpack.c.h.b16 %v361
        %v1690 = vunpack.c.l.b16 %v362
        %v1691 = vunpack.c.h.b16 %v362
        %v1692 = vunpack.c.l.b16 %v363
        %v1693 = vunpack.c.h.b16 %v363
        %v1694 = vunpack.c.l.b16 %v364
        %v1695 = vunpack.c.h.b16 %v364
        %v1696 = vunpack.c.l.b16 %v365
        %v1697 = vunpack.c.h.b16 %v365
        %v1698 = vunpack.c.l.b16 %v366
        %v1699 = vunpack.c.h.b16 %v366
        %v1700 = vunpack.c.l.b16 %v367
        %v1701 = vunpack.c.h.b16 %v367
        %v1702 = vunpack.c.l.b16 %v368
        %v1703 = vunpack.c.h.b16 %v368
        %v1704 = vunpack.c.l.b16 %v369
        %v1705 = vunpack.c.h.b16 %v369
        %v1706 = vunpack.c.l.b16 %v370
        %v1707 = vunpack.c.h.b16 %v370
        %v1708 = vunpack.c.l.b16 %v371
        %v1709 = vunpack.c.h.b16 %v371
        %v1710 = vunpack.c.l.b16 %v372
        %v1711 = vunpack.c.h.b16 %v372
        %v1712 = vunpack.c.l.b16 %v373
        %v1713 = vunpack.c.h.b16 %v373
        %v1714 = vunpack.c.l.b16 %v374
        %v1715 = vunpack.c.h.b16 %v374
        %v1716 = vunpack.c.l.b16 %v375
        %v1717 = vunpack.c.h.b16 %v375
        %v1718 = vunpack.c.l.b16 %v376
        %v1719 = vunpack.c.h.b16 %v376
        %v1720 = vunpack.c.l.b16 %v377
        %v1721 = vunpack.c.h.b16 %v377
        %v1722 = vunpack.c.l.b16 %v378
        %v1723 = vunpack.c.h.b16 %v378
        %v1724 = vunpack.c.l.b16 %v379
        %v1725 = vunpack.c.h.b16 %v379
        %v1726 = vunpack.c.l.b16 %v380
        %v1727 = vunpack.c.h.b16 %v380
        %v1728 = vunpack.c.l.b16 %v381
        %v1729 = vunpack.c.h.b16 %v381
        %v1730 = vunpack.c.l.b16 %v382
        %v1731 = vunpack.c.h.b16 %v382
        %v1732 = vunpack.c.l.b16 %v383
        %v1733 = vunpack.c.h.b16 %v383
        %v1734 = vunpack.c.l.b16 %v384
        %v1735 = vunpack.c.h.b16 %v384
        %v1736 = vunpack.c.l.b16 %v385
        %v1737 = vunpack.c.h.b16 %v385
        %v1738 = vunpack.c.l.b16 %v386
        %v1739 = vunpack.c.h.b16 %v386
        %v1740 = vunpack.c.l.b16 %v387
        %v1741 = vunpack.c.h.b16 %v387
        %v1742 = vunpack.c.l.b16 %v388
        %v1743 = vunpack.c.h.b16 %v388
        %v1744 = vunpack.c.l.b16 %v389
        %v1745 = vunpack.c.h.b16 %v389
        %v1746 = vunpack.c.l.b16 %v390
        %v1747 = vunpack.c.h.b16 %v390
        %v1748 = vunpack.c.l.b16 %v391
        %v1749 = vunpack.c.h.b16 %v391
        %v1750 = vunpack.c.l.b16 %v392
        %v1751 = vunpack.c.h.b16 %v392
        %v1752 = vunpack.c.l.b16 %v393
        %v1753 = vunpack.c.h.b16 %v393
        %v1754 = vunpack.c.l.b16 %v394
        %v1755 = vunpack.c.h.b16 %v394
        %v1756 = vunpack.c.l.b16 %v395
        %v1757 = vunpack.c.h.b16 %v395
        %v1758 = vunpack.c.l.b16 %v396
        %v1759 = vunpack.c.h.b16 %v396
        %v1760 = vunpack.c.l.b16 %v397
        %v1761 = vunpack.c.h.b16 %v397
        %v1762 = vunpack.c.l.b16 %v398
        %v1763 = vunpack.c.h.b16 %v398
        %v1764 = vunpack.c.l.b16 %v399
        %v1765 = vunpack.c.h.b16 %v399
        %v1766 = vunpack.c.l.b16 %v400
        %v1767 = vunpack.c.h.b16 %v400
        %v1768 = vunpack.c.l.b16 %v401
        %v1769 = vunpack.c.h.b16 %v401
        %v1770 = vunpack.c.l.b16 %v402
        %v1771 = vunpack.c.h.b16 %v402
        %v1772 = vunpack.c.l.b16 %v403
        %v1773 = vunpack.c.h.b16 %v403
        %v1774 = vunpack.c.l.b16 %v404
        %v1775 = vunpack.c.h.b16 %v404
        %v1776 = vunpack.c.l.b16 %v405
        %v1777 = vunpack.c.h.b16 %v405
        %v1778 = vunpack.c.l.b16 %v406
        %v1779 = vunpack.c.h.b16 %v406
        %v1780 = vpack.c.b16 %v1528, %v1524
        %v1781 = vpack.c.b16 %v1529, %v1525
        %v1782 = vpack.c.b16 %v1530, %v1526
        %v1783 = vpack.c.b16 %v1531, %v1527
        %v1784 = vpack.c.b16 %v1536, %v1532
        %v1785 = vpack.c.b16 %v1537, %v1533
        %v1786 = vpack.c.b16 %v1538, %v1534
        %v1787 = vpack.c.b16 %v1539, %v1535
        %v1788 = vpack.c.b16 %v1544, %v1540
        %v1789 = vpack.c.b16 %v1545, %v1541
        %v1790 = vpack.c.b16 %v1546, %v1542
        %v1791 = vpack.c.b16 %v1547, %v1543
        %v1792 = vpack.c.b16 %v1552, %v1548
        %v1793 = vpack.c.b16 %v1553, %v1549
        %v1794 = vpack.c.b16 %v1554, %v1550
        %v1795 = vpack.c.b16 %v1555, %v1551
        %v1796 = vpack.c.b16 %v1560, %v1556
        %v1797 = vpack.c.b16 %v1561, %v1557
        %v1798 = vpack.c.b16 %v1562, %v1558
        %v1799 = vpack.c.b16 %v1563, %v1559
        %v1800 = vpack.c.b16 %v1568, %v1564
        %v1801 = vpack.c.b16 %v1569, %v1565
        %v1802 = vpack.c.b16 %v1570, %v1566
        %v1803 = vpack.c.b16 %v1571, %v1567
        %v1804 = vpack.c.b16 %v1576, %v1572
        %v1805 = vpack.c.b16 %v1577, %v1573
        %v1806 = vpack.c.b16 %v1578, %v1574
        %v1807 = vpack.c.b16 %v1579, %v1575
        %v1808 = vpack.c.b16 %v1584, %v1580
        %v1809 = vpack.c.b16 %v1585, %v1581
        %v1810 = vpack.c.b16 %v1586, %v1582
        %v1811 = vpack.c.b16 %v1587, %v1583
        %v1812 = vpack.c.b16 %v1592, %v1588
        %v1813 = vpack.c.b16 %v1593, %v1589
        %v1814 = vpack.c.b16 %v1594, %v1590
        %v1815 = vpack.c.b16 %v1595, %v1591
        %v1816 = vpack.c.b16 %v1600, %v1596
        %v1817 = vpack.c.b16 %v1601, %v1597
        %v1818 = vpack.c.b16 %v1602, %v1598
        %v1819 = vpack.c.b16 %v1603, %v1599
        %v1820 = vpack.c.b16 %v1608, %v1604
        %v1821 = vpack.c.b16 %v1609, %v1605
        %v1822 = vpack.c.b16 %v1610, %v1606
        %v1823 = vpack.c.b16 %v1611, %v1607
        %v1824 = vpack.c.b16 %v1616, %v1612
        %v1825 = vpack.c.b16 %v1617, %v1613
        %v1826 = vpack.c.b16 %v1618, %v1614
        %v1827 = vpack.c.b16 %v1619, %v1615
        %v1828 = vpack.c.b16 %v1624, %v1620
        %v1829 = vpack.c.b16 %v1625, %v1621
        %v1830 = vpack.c.b16 %v1626, %v1622
        %v1831 = vpack.c.b16 %v1627, %v1623
        %v1832 = vpack.c.b16 %v1632, %v1628
        %v1833 = vpack.c.b16 %v1633, %v1629
        %v1834 = vpack.c.b16 %v1634, %v1630
        %v1835 = vpack.c.b16 %v1635, %v1631
        %v1836 = vpack.c.b16 %v1640, %v1636
        %v1837 = vpack.c.b16 %v1641, %v1637
        %v1838 = vpack.c.b16 %v1642, %v1638
        %v1839 = vpack.c.b16 %v1643, %v1639
        %v1840 = vpack.c.b16 %v1648, %v1644
        %v1841 = vpack.c.b16 %v1649, %v1645
        %v1842 = vpack.c.b16 %v1650, %v1646
        %v1843 = vpack.c.b16 %v1651, %v1647
        %v1844 = vpack.c.b16 %v1656, %v1652
        %v1845 = vpack.c.b16 %v1657, %v1653
        %v1846 = vpack.c.b16 %v1658, %v1654
        %v1847 = vpack.c.b16 %v1659, %v1655
        %v1848 = vpack.c.b16 %v1664, %v1660
        %v1849 = vpack.c.b16 %v1665, %v1661
        %v1850 = vpack.c.b16 %v1666, %v1662
        %v1851 = vpack.c.b16 %v1667, %v1663
        %v1852 = vpack.c.b16 %v1672, %v1668
        %v1853 = vpack.c.b16 %v1673, %v1669
        %v1854 = vpack.c.b16 %v1674, %v1670
        %v1855 = vpack.c.b16 %v1675, %v1671
        %v1856 = vpack.c.b16 %v1680, %v1676
        %v1857 = vpack.c.b16 %v1681, %v1677
        %v1858 = vpack.c.b16 %v1682, %v1678
        %v1859 = vpack.c.b16 %v1683, %v1679
        %v1860 = vpack.c.b16 %v1688, %v1684
        %v1861 = vpack.c.b16 %v1689, %v1685
        %v1862 = vpack.c.b16 %v1690, %v1686
        %v1863 = vpack.c.b16 %v1691, %v1687
        %v1864 = vpack.c.b16 %v1696, %v1692
        %v1865 = vpack.c.b16 %v1697, %v1693
        %v1866 = vpack.c.b16 %v1698, %v1694
        %v1867 = vpack.c.b16 %v1699, %v1695
        %v1868 = vpack.c.b16 %v1704, %v1700
        %v1869 = vpack.c.b16 %v1705, %v1701
        %v1870 = vpack.c.b16 %v1706, %v1702
        %v1871 = vpack.c.b16 %v1707, %v1703
        %v1872 = vpack.c.b16 %v1712, %v1708
        %v1873 = vpack.c.b16 %v1713, %v1709
        %v1874 = vpack.c.b16 %v1714, %v1710
        %v1875 = vpack.c.b16 %v1715, %v1711
        %v1876 = vpack.c.b16 %v1720, %v1716
        %v1877 = vpack.c.b16 %v1721, %v1717
        %v1878 = vpack.c.b16 %v1722, %v1718
        %v1879 = vpack.c.b16 %v1723, %v1719
        %v1880 = vpack.c.b16 %v1728, %v1724
        %v1881 = vpack.c.b16 %v1729, %v1725
        %v1882 = vpack.c.b16 %v1730, %v1726
        %v1883 = vpack.c.b16 %v1731, %v1727
        %v1884 = vpack.c.b16 %v1736, %v1732
        %v1885 = vpack.c.b16 %v1737, %v1733
        %v1886 = vpack.c.b16 %v1738, %v1734
        %v1887 = vpack.c.b16 %v1739, %v1735
        %v1888 = vpack.c.b16 %v1744, %v1740
        %v1889 = vpack.c.b16 %v1745, %v1741
        %v1890 = vpack.c.b16 %v1746, %v1742
        %v1891 = vpack.c.b16 %v1747, %v1743
        %v1892 = vpack.c.b16 %v1752, %v1748
        %v1893 = vpack.c.b16 %v1753, %v1749
        %v1894 = vpack.c.b16 %v1754, %v1750
        %v1895 = vpack.c.b16 %v1755, %v1751
        %v1896 = vpack.c.b16 %v1760, %v1756
        %v1897 = vpack.c.b16 %v1761, %v1757
        %v1898 = vpack.c.b16 %v1762, %v1758
        %v1899 = vpack.c.b16 %v1763, %v1759
        %v1900 = vpack.c.b16 %v1768, %v1764
        %v1901 = vpack.c.b16 %v1769, %v1765
        %v1902 = vpack.c.b16 %v1770, %v1766
        %v1903 = vpack.c.b16 %v1771, %v1767
        %v1904 = vpack.c.b16 %v1776, %v1772
        %v1905 = vpack.c.b16 %v1777, %v1773
        %v1906 = vpack.c.b16 %v1778, %v1774
        %v1907 = vpack.c.b16 %v1779, %v1775
        %2036 = vmatpush.bf16.msra.mxu0 %v1808
        %2037 = vmatpush.bf16.msra.mxu0 %v1804
        %2038 = vmatpush.bf16.msra.mxu0 %v1800
        %2039 = vmatpush.bf16.msra.mxu0 %v1796
        %2040 = vmatpush.bf16.msra.mxu0 %v1792
        %2041 = vmatpush.bf16.msra.mxu0 %v1788
        %2042 = vmatpush.bf16.msra.mxu0 %v1784
        %2043 = vmatpush.bf16.msra.mxu0 %v1780
        %2044 = vmatmul.bf16.gmra.mxu0 %v275
        %v2045 = vpop.f32.mrf.mxu0
        %v2046 = vadd.f32 %v1237, %v2045
        %v2047 = vpop.f32.mrf.mxu0
        %2048 = vdwg.mxu0
        %2049 = vmatpush.bf16.msra.mxu0 %v1840
        %2050 = vmatpush.bf16.msra.mxu0 %v1836
        %2051 = vmatpush.bf16.msra.mxu0 %v1832
        %2052 = vmatpush.bf16.msra.mxu0 %v1828
        %2053 = vmatpush.bf16.msra.mxu0 %v1824
        %2054 = vmatpush.bf16.msra.mxu0 %v1820
        %2055 = vmatpush.bf16.msra.mxu0 %v1816
        %2056 = vmatpush.bf16.msra.mxu0 %v1812
        %2057 = vmatmul.bf16.gmra.mxu0 %v276
        %v2058 = vpop.f32.mrf.mxu0
        %v2059 = vadd.f32 %v2046, %v2058
        %v2060 = vpop.f32.mrf.mxu0
        %2061 = vdwg.mxu0
        %2062 = vmatpush.bf16.msra.mxu0 %v1872
        %2063 = vmatpush.bf16.msra.mxu0 %v1868
        %2064 = vmatpush.bf16.msra.mxu0 %v1864
        %2065 = vmatpush.bf16.msra.mxu0 %v1860
        %2066 = vmatpush.bf16.msra.mxu0 %v1856
        %2067 = vmatpush.bf16.msra.mxu0 %v1852
        %2068 = vmatpush.bf16.msra.mxu0 %v1848
        %2069 = vmatpush.bf16.msra.mxu0 %v1844
        %2070 = vmatmul.bf16.gmra.mxu0 %v277
        %v2071 = vpop.f32.mrf.mxu0
        %v2072 = vadd.f32 %v2059, %v2071
        %v2073 = vpop.f32.mrf.mxu0
        %2074 = vdwg.mxu0
        %2075 = vmatpush.bf16.msra.mxu0 %v1904
        %2076 = vmatpush.bf16.msra.mxu0 %v1900
        %2077 = vmatpush.bf16.msra.mxu0 %v1896
        %2078 = vmatpush.bf16.msra.mxu0 %v1892
        %2079 = vmatpush.bf16.msra.mxu0 %v1888
        %2080 = vmatpush.bf16.msra.mxu0 %v1884
        %2081 = vmatpush.bf16.msra.mxu0 %v1880
        %2082 = vmatpush.bf16.msra.mxu0 %v1876
        %2083 = vmatmul.bf16.gmra.mxu0 %v278
        %v2084 = vpop.f32.mrf.mxu0
        %v2085 = vadd.f32 %v2072, %v2084
        %v2086 = vpop.f32.mrf.mxu0
        %2087 = vdwg.mxu0
        %2088 = vmatpush.bf16.msra.mxu0 %v1809
        %2089 = vmatpush.bf16.msra.mxu0 %v1805
        %2090 = vmatpush.bf16.msra.mxu0 %v1801
        %2091 = vmatpush.bf16.msra.mxu0 %v1797
        %2092 = vmatpush.bf16.msra.mxu0 %v1793
        %2093 = vmatpush.bf16.msra.mxu0 %v1789
        %2094 = vmatpush.bf16.msra.mxu0 %v1785
        %2095 = vmatpush.bf16.msra.mxu0 %v1781
        %2096 = vmatmul.bf16.gmra.mxu0 %v275
        %v2097 = vpop.f32.mrf.mxu0
        %v2098 = vadd.f32 %v1289, %v2097
        %v2099 = vpop.f32.mrf.mxu0
        %2100 = vdwg.mxu0
        %2101 = vmatpush.bf16.msra.mxu0 %v1841
        %2102 = vmatpush.bf16.msra.mxu0 %v1837
        %2103 = vmatpush.bf16.msra.mxu0 %v1833
        %2104 = vmatpush.bf16.msra.mxu0 %v1829
        %2105 = vmatpush.bf16.msra.mxu0 %v1825
        %2106 = vmatpush.bf16.msra.mxu0 %v1821
        %2107 = vmatpush.bf16.msra.mxu0 %v1817
        %2108 = vmatpush.bf16.msra.mxu0 %v1813
        %2109 = vmatmul.bf16.gmra.mxu0 %v276
        %v2110 = vpop.f32.mrf.mxu0
        %v2111 = vadd.f32 %v2098, %v2110
        %v2112 = vpop.f32.mrf.mxu0
        %2113 = vdwg.mxu0
        %2114 = vmatpush.bf16.msra.mxu0 %v1873
        %2115 = vmatpush.bf16.msra.mxu0 %v1869
        %2116 = vmatpush.bf16.msra.mxu0 %v1865
        %2117 = vmatpush.bf16.msra.mxu0 %v1861
        %2118 = vmatpush.bf16.msra.mxu0 %v1857
        %2119 = vmatpush.bf16.msra.mxu0 %v1853
        %2120 = vmatpush.bf16.msra.mxu0 %v1849
        %2121 = vmatpush.bf16.msra.mxu0 %v1845
        %2122 = vmatmul.bf16.gmra.mxu0 %v277
        %v2123 = vpop.f32.mrf.mxu0
        %v2124 = vadd.f32 %v2111, %v2123
        %v2125 = vpop.f32.mrf.mxu0
        %2126 = vdwg.mxu0
        %2127 = vmatpush.bf16.msra.mxu0 %v1905
        %2128 = vmatpush.bf16.msra.mxu0 %v1901
        %2129 = vmatpush.bf16.msra.mxu0 %v1897
        %2130 = vmatpush.bf16.msra.mxu0 %v1893
        %2131 = vmatpush.bf16.msra.mxu0 %v1889
        %2132 = vmatpush.bf16.msra.mxu0 %v1885
        %2133 = vmatpush.bf16.msra.mxu0 %v1881
        %2134 = vmatpush.bf16.msra.mxu0 %v1877
        %2135 = vmatmul.bf16.gmra.mxu0 %v278
        %v2136 = vpop.f32.mrf.mxu0
        %v2137 = vadd.f32 %v2124, %v2136
        %v2138 = vpop.f32.mrf.mxu0
        %2139 = vdwg.mxu0
        %2140 = vmatpush.bf16.msra.mxu0 %v1810
        %2141 = vmatpush.bf16.msra.mxu0 %v1806
        %2142 = vmatpush.bf16.msra.mxu0 %v1802
        %2143 = vmatpush.bf16.msra.mxu0 %v1798
        %2144 = vmatpush.bf16.msra.mxu0 %v1794
        %2145 = vmatpush.bf16.msra.mxu0 %v1790
        %2146 = vmatpush.bf16.msra.mxu0 %v1786
        %2147 = vmatpush.bf16.msra.mxu0 %v1782
        %2148 = vmatmul.bf16.gmra.mxu0 %v275
        %v2149 = vpop.f32.mrf.mxu0
        %v2150 = vadd.f32 %v1341, %v2149
        %v2151 = vpop.f32.mrf.mxu0
        %2152 = vdwg.mxu0
        %2153 = vmatpush.bf16.msra.mxu0 %v1842
        %2154 = vmatpush.bf16.msra.mxu0 %v1838
        %2155 = vmatpush.bf16.msra.mxu0 %v1834
        %2156 = vmatpush.bf16.msra.mxu0 %v1830
        %2157 = vmatpush.bf16.msra.mxu0 %v1826
        %2158 = vmatpush.bf16.msra.mxu0 %v1822
        %2159 = vmatpush.bf16.msra.mxu0 %v1818
        %2160 = vmatpush.bf16.msra.mxu0 %v1814
        %2161 = vmatmul.bf16.gmra.mxu0 %v276
        %v2162 = vpop.f32.mrf.mxu0
        %v2163 = vadd.f32 %v2150, %v2162
        %v2164 = vpop.f32.mrf.mxu0
        %2165 = vdwg.mxu0
        %2166 = vmatpush.bf16.msra.mxu0 %v1874
        %2167 = vmatpush.bf16.msra.mxu0 %v1870
        %2168 = vmatpush.bf16.msra.mxu0 %v1866
        %2169 = vmatpush.bf16.msra.mxu0 %v1862
        %2170 = vmatpush.bf16.msra.mxu0 %v1858
        %2171 = vmatpush.bf16.msra.mxu0 %v1854
        %2172 = vmatpush.bf16.msra.mxu0 %v1850
        %2173 = vmatpush.bf16.msra.mxu0 %v1846
        %2174 = vmatmul.bf16.gmra.mxu0 %v277
        %v2175 = vpop.f32.mrf.mxu0
        %v2176 = vadd.f32 %v2163, %v2175
        %v2177 = vpop.f32.mrf.mxu0
        %2178 = vdwg.mxu0
        %2179 = vmatpush.bf16.msra.mxu0 %v1906
        %2180 = vmatpush.bf16.msra.mxu0 %v1902
        %2181 = vmatpush.bf16.msra.mxu0 %v1898
        %2182 = vmatpush.bf16.msra.mxu0 %v1894
        %2183 = vmatpush.bf16.msra.mxu0 %v1890
        %2184 = vmatpush.bf16.msra.mxu0 %v1886
        %2185 = vmatpush.bf16.msra.mxu0 %v1882
        %2186 = vmatpush.bf16.msra.mxu0 %v1878
        %2187 = vmatmul.bf16.gmra.mxu0 %v278
        %v2188 = vpop.f32.mrf.mxu0
        %v2189 = vadd.f32 %v2176, %v2188
        %v2190 = vpop.f32.mrf.mxu0
        %2191 = vdwg.mxu0
        %2192 = vmatpush.bf16.msra.mxu0 %v1811
        %2193 = vmatpush.bf16.msra.mxu0 %v1807
        %2194 = vmatpush.bf16.msra.mxu0 %v1803
        %2195 = vmatpush.bf16.msra.mxu0 %v1799
        %2196 = vmatpush.bf16.msra.mxu0 %v1795
        %2197 = vmatpush.bf16.msra.mxu0 %v1791
        %2198 = vmatpush.bf16.msra.mxu0 %v1787
        %2199 = vmatpush.bf16.msra.mxu0 %v1783
        %2200 = vmatmul.bf16.gmra.mxu0 %v275
        %v2201 = vpop.f32.mrf.mxu0
        %v2202 = vadd.f32 %v1393, %v2201
        %v2203 = vpop.f32.mrf.mxu0
        %2204 = vdwg.mxu0
        %2205 = vmatpush.bf16.msra.mxu0 %v1843
        %2206 = vmatpush.bf16.msra.mxu0 %v1839
        %2207 = vmatpush.bf16.msra.mxu0 %v1835
        %2208 = vmatpush.bf16.msra.mxu0 %v1831
        %2209 = vmatpush.bf16.msra.mxu0 %v1827
        %2210 = vmatpush.bf16.msra.mxu0 %v1823
        %2211 = vmatpush.bf16.msra.mxu0 %v1819
        %2212 = vmatpush.bf16.msra.mxu0 %v1815
        %2213 = vmatmul.bf16.gmra.mxu0 %v276
        %v2214 = vpop.f32.mrf.mxu0
        %v2215 = vadd.f32 %v2202, %v2214
        %v2216 = vpop.f32.mrf.mxu0
        %2217 = vdwg.mxu0
        %2218 = vmatpush.bf16.msra.mxu0 %v1875
        %2219 = vmatpush.bf16.msra.mxu0 %v1871
        %2220 = vmatpush.bf16.msra.mxu0 %v1867
        %2221 = vmatpush.bf16.msra.mxu0 %v1863
        %2222 = vmatpush.bf16.msra.mxu0 %v1859
        %2223 = vmatpush.bf16.msra.mxu0 %v1855
        %2224 = vmatpush.bf16.msra.mxu0 %v1851
        %2225 = vmatpush.bf16.msra.mxu0 %v1847
        %2226 = vmatmul.bf16.gmra.mxu0 %v277
        %v2227 = vpop.f32.mrf.mxu0
        %v2228 = vadd.f32 %v2215, %v2227
        %v2229 = vpop.f32.mrf.mxu0
        %2230 = vdwg.mxu0
        %2231 = vmatpush.bf16.msra.mxu0 %v1907
        %2232 = vmatpush.bf16.msra.mxu0 %v1903
        %2233 = vmatpush.bf16.msra.mxu0 %v1899
        %2234 = vmatpush.bf16.msra.mxu0 %v1895
        %2235 = vmatpush.bf16.msra.mxu0 %v1891
        %2236 = vmatpush.bf16.msra.mxu0 %v1887
        %2237 = vmatpush.bf16.msra.mxu0 %v1883
        %2238 = vmatpush.bf16.msra.mxu0 %v1879
        %2239 = vmatmul.bf16.gmra.mxu0 %v278
        %v2240 = vpop.f32.mrf.mxu0
        %v2241 = vadd.f32 %v2228, %v2240
        %v2242 = vpop.f32.mrf.mxu0
        %2243 = vdwg.mxu0
        %v2244 = vld [vmem:[%s6] sm:$0xf]
        %v2246 = vperm.slane %v2244, 0
        %v2247 = vperm.slane %v2244, 1
        %v2248 = vperm.slane %v2244, 2
        %v2249 = vperm.slane %v2244, 3
        %v2254 = vadd.f32 %v2085, %v2246
        %v2255 = vadd.f32 %v2137, %v2247
        %v2256 = vadd.f32 %v2189, %v2248
        %v2257 = vadd.f32 %v2241, %v2249
        %v2258 = vtanh.pop %v2254
        %v2259 = vtanh.pop %v2255
        %v2260 = vtanh.pop %v2256
        %v2261 = vtanh.pop %v2257
        %v2266 = vrot.slane %v2259, 7
        %v2267 = vrot.slane %v2260, 6
        %v2268 = vrot.slane %v2261, 5
        %vm2269 = vcmask 1040384
        %v2270 = vsel %vm2269, %v2258, %v2266
        %vm2271 = vcmask 1042434
        %v2272 = vsel %vm2271, %v2267, %v2268
        %vm2273 = vcmask 1041408
        %v2274 = vsel %vm2273, %v2270, %v2272
        %s2276 = smul.u32 %s257, 4
        %s2277 = scalar_lea.vmem [#allocation12], %s2276
        %v2278 = vlaneseq
        %vm2279 = vcmp.ge.s32.totalorder %v2278, 0
        %vm2280 = vcmp.lt.s32.totalorder %v2278, 512
        %vm2281 = vmand %vm2279, %vm2280
        %2282 = vst.msk [vmem:[%s2277] sm:$0xf] %vm2281, %v2274
        // Predicated region
        $region53: #{tpu_custom_call.1} parent=35 // pred_check
          %p2283 = pneg %p136
        $region54: #{tpu_custom_call.1} parent=35 // pred_check_branch
          %2285 = sbr.rel (%p2283) target = $region56
        $region55: #{tpu_custom_call.1} parent=35 // pred_region
          %2287 = vsyncadd [#allocation8], 0
          %s2288 = sshll.u32 [#allocation12], 4
          %s2289 = int_to_ptr.vmem [resolvable:$true] %s2288
          %s2290 = sshll.u32 %s7, 4
          %s2291 = int_to_ptr.hbm [resolvable:$true] %s2290
          %2296 = dma.vmem_to_hbm [thread:$0]  %s2289, 448, %s2291, [#allocation8], 64, 64, 4
        $region56: #{tpu_custom_call.1} parent=35 // pred_fallthru
          _
        // Predicated region
        $region57: #{tpu_custom_call.1} parent=35 // pred_check
          %p2297 = pneg %p136
        $region58: #{tpu_custom_call.1} parent=35 // pred_check_branch
          %2299 = sbr.rel (%p2297) target = $region60
        $region59: #{tpu_custom_call.1} parent=35 // pred_region
          %2301 = dma.done [#allocation8], 448
        $region60: #{tpu_custom_call.1} parent=35 // pred_fallthru
          _
      $region36: #{tpu_custom_call.1} parent=5 // pred_fallthru
        _
      %p2302 = scmp.le.s32.totalorder 2, %s34
      // Predicated region
      $region61: #{tpu_custom_call.1} parent=5 // pred_check
        %p2303 = pneg %p2302
      $region62: #{tpu_custom_call.1} parent=5 // pred_check_branch
        %2305 = sbr.rel (%p2303) target = $region64
      $region63: #{tpu_custom_call.1} parent=5 // pred_region
        %s2306 = ssub.s32 %s34, 2
      $region64: #{tpu_custom_call.1} parent=5 // pred_fallthru
        _
    $region6: #{tpu_custom_call.1} parent=1 // loop_footer
      %s38 = sadd.s32 1, %s34
    $region7: #{tpu_custom_call.1} parent=1 // loop_footer_branch
      %33 = sbr.rel target = $region3
    $region8: #{tpu_custom_call.1} parent=1 // loop_exit
      _
    %2307 = vsyncpa [#allocation7], 1
    %s2308 = scalar_lea.sflag [#allocation7], 1
    %2309 = vsyncpa %s2308, 1
    %2310 = vsyncpa [#allocation10], 1
    %2311 = vsyncpa [#allocation8], 1
    %s2312 = scalar_lea.sflag [#allocation8], 1
    %2313 = vsyncpa %s2312, 1

</llo_original>
